<compile_context>
chip_gen: v6e
topology: v6e:2x2x1
jax: 0.10.0
libtpu: 0.0.40
codegen_flags: <defaults>
</compile_context>

<pallas_src>
import functools

import jax
import jax.numpy as jnp
from jax.experimental import pallas as pl
from jax.experimental.pallas import tpu as pltpu


def _round_up(n, m):
    return ((n + m - 1) // m) * m


def _cdiv(a, b):
    return (a + b - 1) // b


def _vmem_capacity_bytes():
    """Best-effort VMEM capacity; conservative 64 MiB (v7x per-TC) fallback."""
    try:
        info = pltpu.get_tpu_info()
        cap = getattr(info, "vmem_capacity_bytes", None)
        if cap:
            return int(cap)
    except Exception:
        pass
    return 64 * 1024 * 1024


def _group_layers(dims_pad, itemsize, weight_budget_bytes):
    """Greedily group consecutive layers so each group's padded weights+biases
    fit under weight_budget_bytes (v7x 64 MiB VMEM fallback)."""
    n_layers = len(dims_pad) - 1
    groups = []
    start, acc = 0, 0
    for li in range(n_layers):
        wb = (dims_pad[li] * dims_pad[li + 1] + dims_pad[li + 1]) * itemsize
        if acc > 0 and acc + wb > weight_budget_bytes:
            groups.append((start, li))
            start, acc = li, 0
        acc += wb
    groups.append((start, n_layers))
    return groups


def _fused_mlp_kernel(*refs, n_layers, compute_dtype, relu_last, precision):
    """refs = (x_ref, w_0..w_{L-1}, b_0..b_{L-1}, o_ref).

    All layer matmuls run back-to-back on the MXU with the activation kept in
    vregs/VMEM; f32 accumulation, bias-add + relu epilogue in compute_dtype
    (f32 on the exact path, bf16 on the fast path).
    """
    x_ref = refs[0]
    w_refs = refs[1:1 + n_layers]
    b_refs = refs[1 + n_layers:1 + 2 * n_layers]
    o_ref = refs[1 + 2 * n_layers]

    h = x_ref[...].astype(compute_dtype)
    for li in range(n_layers):
        acc = jnp.dot(h, w_refs[li][...],
                      preferred_element_type=jnp.float32,
                      precision=precision)
        z = acc.astype(compute_dtype) + b_refs[li][...]   # (1, Dout) broadcast
        if li < n_layers - 1 or relu_last:
            z = jnp.maximum(z, 0.0)
        h = z
    o_ref[...] = h.astype(o_ref.dtype)


def _fused_group(x_p, ws, bs, *, dims_pad, TM, grid_b, B, relu_last,
                 compute_dtype, out_dtype, vmem_cap_bytes):
    """One fused pallas_call over a consecutive group of layers."""
    n_layers = len(ws)
    din_p, dout_p = dims_pad[0], dims_pad[-1]
    itemsize = jnp.dtype(compute_dtype).itemsize
    out_itemsize = jnp.dtype(out_dtype).itemsize

    # x / out: batch-tiled, double-buffered pipeline. Weights/biases: whole
    # array resident in VMEM (single copy, no per-step DMA / double buffer).
    resident = pl.BlockSpec(memory_space=pltpu.MemorySpace.VMEM)
    in_specs = [pl.BlockSpec((TM, din_p), lambda i: (i, 0))]
    in_specs += [resident] * (2 * n_layers)
    out_specs = pl.BlockSpec((TM, dout_p), lambda i: (i, 0))

    precision = (jax.lax.Precision.HIGHEST
                 if compute_dtype == jnp.float32 else None)
    kernel = functools.partial(
        _fused_mlp_kernel, n_layers=n_layers, compute_dtype=compute_dtype,
        relu_last=relu_last, precision=precision)

    # Explicit VMEM limit from the real footprint + headroom.
    w_bytes = sum(dims_pad[i] * dims_pad[i + 1] for i in range(n_layers)) * itemsize
    b_bytes = sum(dims_pad[i + 1] for i in range(n_layers)) * itemsize
    io_bytes = 2 * TM * din_p * itemsize + 2 * TM * dout_p * out_itemsize
    act_bytes = sum(TM * dims_pad[i + 1] * 4 for i in range(n_layers))  # f32 acc
    vmem_limit = int(1.25 * (w_bytes + b_bytes + io_bytes + act_bytes))
    vmem_limit = max(vmem_limit, 16 * 1024 * 1024)
    vmem_limit = min(vmem_limit, int(0.9 * vmem_cap_bytes))

    flops = 2 * B * sum(dims_pad[i] * dims_pad[i + 1] for i in range(n_layers))
    bytes_accessed = (B * din_p * itemsize + w_bytes + b_bytes
                      + B * dout_p * out_itemsize)

    return pl.pallas_call(
        kernel,
        out_shape=jax.ShapeDtypeStruct((B, dout_p), out_dtype),
        grid=(grid_b,),
        in_specs=in_specs,
        out_specs=out_specs,
        compiler_params=pltpu.CompilerParams(
            dimension_semantics=("parallel",),
            vmem_limit_bytes=vmem_limit),
        cost_estimate=pl.CostEstimate(
            flops=flops, transcendentals=0, bytes_accessed=bytes_accessed),
    )(x_p, *ws, *bs)


def prepare_mlp_params(params, compute_dtype=jnp.bfloat16, feature_align=128):
    """Pad weights/biases ONCE (outside the hot path).

    params: list of (w, b) with w: (Din, Dout) [= transpose of torch layout], b: (Dout,)
    feature_align: 128 (lane width); 256 can help v6e/v7x MXU fill for small dims.
    """
    dims = [params[0][0].shape[0]] + [w.shape[1] for (w, _) in params]
    dims_pad = [_round_up(d, feature_align) for d in dims]
    ws_p, bs_p = [], []
    for li, (w, b) in enumerate(params):
        din, dout = dims[li], dims[li + 1]
        din_p, dout_p = dims_pad[li], dims_pad[li + 1]
        wp = jnp.pad(w.astype(compute_dtype),
                     ((0, din_p - din), (0, dout_p - dout)))
        bp = jnp.pad(b.astype(compute_dtype), (0, dout_p - dout))[None, :]
        ws_p.append(wp)
        bs_p.append(bp)
    return {"ws": ws_p, "bs": bs_p, "dims": dims, "dims_pad": dims_pad,
            "compute_dtype": compute_dtype}


def mlp_forward(x, prepared, *, max_batch_tile=256,
                weight_vmem_budget_bytes=None):
    """Fused MLP forward: relu on all layers except the last (matches MLP.forward).

    x:        (B, D0) float32 (or bf16)
    prepared: output of prepare_mlp_params
    Returns (B, D_last) in the prepared compute dtype (f32 on the exact path).
    """
    ws, bs = prepared["ws"], prepared["bs"]
    dims, dims_pad = prepared["dims"], prepared["dims_pad"]
    compute_dtype = prepared["compute_dtype"]
    B, D0 = x.shape
    assert D0 == dims[0], f"expected input dim {dims[0]}, got {D0}"

    vmem_cap = _vmem_capacity_bytes()
    if weight_vmem_budget_bytes is None:
        weight_vmem_budget_bytes = int(0.5 * vmem_cap)

    # Batch tile: bf16 packs 16 rows / sublane-pair; guarantee >= 2 grid steps
    # when the batch allows so both v7x TensorCores get work.
    sub = 16 if jnp.dtype(compute_dtype) == jnp.dtype(jnp.bfloat16) else 8
    TM = min(max_batch_tile, _round_up(B, sub))
    if B > sub and _cdiv(B, TM) < 2:
        TM = max(sub, _round_up(_cdiv(B, 2), sub))
    grid_b = _cdiv(B, TM)   # ragged last tile handled/masked by Pallas

    # Feature-dim pad + cast in one shot; NO batch-dim pad copy.
    x_p = x
    if dims_pad[0] != D0:
        x_p = jnp.pad(x_p, ((0, 0), (0, dims_pad[0] - D0)))
    x_p = x_p.astype(compute_dtype)

    itemsize = jnp.dtype(compute_dtype).itemsize
    groups = _group_layers(dims_pad, itemsize, weight_vmem_budget_bytes)

    h = x_p
    for gi, (s, e) in enumerate(groups):
        last_group = gi == len(groups) - 1
        h = _fused_group(
            h, ws[s:e], bs[s:e],
            dims_pad=dims_pad[s:e + 1],
            TM=TM, grid_b=grid_b, B=B,
            relu_last=not last_group,          # global final layer has no relu
            compute_dtype=compute_dtype,
            out_dtype=compute_dtype,
            vmem_cap_bytes=vmem_cap)
    return h[:, :dims[-1]]


def init_mlp_params(key, layerdims, init_scale=1.0):
    """Mirrors MLP.__init__ with init_scale set:
    weight ~ Normal(0, init_scale / sqrt(fan_in)), bias = 0.
    Weights stored as (in, out) = transpose of torch's (out, in)."""
    params = []
    for i in range(len(layerdims) - 1):
        key, sub = jax.random.split(key)
        fan_in, fan_out = layerdims[i], layerdims[i + 1]
        std = init_scale / jnp.sqrt(jnp.asarray(fan_in, jnp.float32))
        w = jax.random.normal(sub, (fan_in, fan_out), dtype=jnp.float32) * std
        b = jnp.zeros((fan_out,), dtype=jnp.float32)
        params.append((w, b))
    return params


def _reference_mlp(x, params):
    ref = x
    for li, (w, b) in enumerate(params):
        ref = ref @ w + b
        if li < len(params) - 1:
            ref = jnp.maximum(ref, 0.0)
    return ref


if __name__ == "__main__":
    key = jax.random.PRNGKey(0)
    layerdims = [32, 64, 64, 16]
    batch = 8

    kx, kp, kx2 = jax.random.split(key, 3)
    x = jax.random.normal(kx, (batch, layerdims[0]), dtype=jnp.float32)
    params = init_mlp_params(kp, layerdims, init_scale=1.0)
    ref = _reference_mlp(x, params)

    # --- f32 path: exact parity with the PyTorch module semantics ---
    prep_f32 = prepare_mlp_params(params, compute_dtype=jnp.float32)
    y = jax.block_until_ready(mlp_forward(x, prep_f32))
    assert y.shape == (batch, layerdims[-1])
    assert jnp.allclose(y, ref, atol=1e-5, rtol=1e-5)

    # --- bf16 default path (f32 MXU accumulation), looser tolerance ---
    prep_bf16 = prepare_mlp_params(params)   # compute_dtype defaults to bfloat16
    y_bf = jax.block_until_ready(mlp_forward(x, prep_bf16))
    assert y_bf.shape == (batch, layerdims[-1])
    assert jnp.allclose(y_bf.astype(jnp.float32), ref, atol=5e-2, rtol=5e-2)

    # --- larger batch: >=2-step parallel grid + ragged (masked) last tile ---
    xb = jax.random.normal(kx2, (250, layerdims[0]), dtype=jnp.float32)
    refb = _reference_mlp(xb, params)
    yb = jax.block_until_ready(mlp_forward(xb, prep_f32))
    assert yb.shape == (250, layerdims[-1])
    assert jnp.allclose(yb, refb, atol=1e-4, rtol=1e-4)

    # --- force the layer-grouped (v7x VMEM) fallback path with a tiny budget ---
    y_split = jax.block_until_ready(
        mlp_forward(x, prep_f32, weight_vmem_budget_bytes=64 * 1024))
    assert jnp.allclose(y_split, ref, atol=1e-5, rtol=1e-5)

    print("KERNEL_OK")
</pallas_src>

<mosaic_0001>
module attributes {stable_mosaic.version = 11 : i64} {
  func.func @_fused_mlp_kernel(%arg0: i32, %arg1: memref<8x128xf32, #tpu.memory_space<vmem>>, %arg2: memref<128x128xf32, #tpu.memory_space<vmem>>, %arg3: memref<128x128xf32, #tpu.memory_space<vmem>>, %arg4: memref<128x128xf32, #tpu.memory_space<vmem>>, %arg5: memref<1x128xf32, #tpu.memory_space<vmem>>, %arg6: memref<1x128xf32, #tpu.memory_space<vmem>>, %arg7: memref<1x128xf32, #tpu.memory_space<vmem>>, %arg8: memref<8x128xf32, #tpu.memory_space<vmem>>) attributes {dimension_semantics = [#tpu.dimension_semantics<parallel>], iteration_bounds = array<i64: 1>, scalar_prefetch = 0 : i64, scratch_operands = 0 : i64, tpu.core_type = #tpu.core_type<tc>, window_params = [{transform_indices = @transform_0, window_bounds = array<i64: 8, 128>}, {pipeline_mode = #tpu.pipeline_mode<synchronous>, transform_indices = @transform_1, window_bounds = array<i64: 128, 128>}, {pipeline_mode = #tpu.pipeline_mode<synchronous>, transform_indices = @transform_2, window_bounds = array<i64: 128, 128>}, {pipeline_mode = #tpu.pipeline_mode<synchronous>, transform_indices = @transform_3, window_bounds = array<i64: 128, 128>}, {pipeline_mode = #tpu.pipeline_mode<synchronous>, transform_indices = @transform_4, window_bounds = array<i64: 1, 128>}, {pipeline_mode = #tpu.pipeline_mode<synchronous>, transform_indices = @transform_5, window_bounds = array<i64: 1, 128>}, {pipeline_mode = #tpu.pipeline_mode<synchronous>, transform_indices = @transform_6, window_bounds = array<i64: 1, 128>}, {transform_indices = @transform_7, window_bounds = array<i64: 8, 128>}]} {
    %c0 = arith.constant 0 : index
    %c0_0 = arith.constant 0 : index
    %0 = vector.load %arg1[%c0, %c0_0] : memref<8x128xf32, #tpu.memory_space<vmem>>, vector<8x128xf32>
    %c0_1 = arith.constant 0 : index
    %c0_2 = arith.constant 0 : index
    %1 = vector.load %arg2[%c0_1, %c0_2] : memref<128x128xf32, #tpu.memory_space<vmem>>, vector<128x128xf32>
    %cst = arith.constant dense<0.000000e+00> : vector<8x128xf32>
    %2 = tpu.matmul %0, %1, %cst {dimension_numbers = #tpu.dot_dimension_numbers<[1], [0], [0], [1], [0, 0, 1, 1], [], []>, precision = #tpu.contract_precision<fp32>} : vector<8x128xf32>, vector<128x128xf32>, vector<8x128xf32> -> vector<8x128xf32>
    %c0_3 = arith.constant 0 : index
    %c0_4 = arith.constant 0 : index
    %3 = vector.load %arg5[%c0_3, %c0_4] : memref<1x128xf32, #tpu.memory_space<vmem>>, vector<1x128xf32>
    %4 = vector.broadcast %3 : vector<1x128xf32> to vector<8x128xf32>
    %5 = arith.addf %2, %4 : vector<8x128xf32>
    %cst_5 = arith.constant 0.000000e+00 : f32
    %6 = vector.broadcast %cst_5 : f32 to vector<8x128xf32>
    %7 = arith.maximumf %5, %6 : vector<8x128xf32>
    %c0_6 = arith.constant 0 : index
    %c0_7 = arith.constant 0 : index
    %8 = vector.load %arg3[%c0_6, %c0_7] : memref<128x128xf32, #tpu.memory_space<vmem>>, vector<128x128xf32>
    %cst_8 = arith.constant dense<0.000000e+00> : vector<8x128xf32>
    %9 = tpu.matmul %7, %8, %cst_8 {dimension_numbers = #tpu.dot_dimension_numbers<[1], [0], [0], [1], [0, 0, 1, 1], [], []>, precision = #tpu.contract_precision<fp32>} : vector<8x128xf32>, vector<128x128xf32>, vector<8x128xf32> -> vector<8x128xf32>
    %c0_9 = arith.constant 0 : index
    %c0_10 = arith.constant 0 : index
    %10 = vector.load %arg6[%c0_9, %c0_10] : memref<1x128xf32, #tpu.memory_space<vmem>>, vector<1x128xf32>
    %11 = vector.broadcast %10 : vector<1x128xf32> to vector<8x128xf32>
    %12 = arith.addf %9, %11 : vector<8x128xf32>
    %cst_11 = arith.constant 0.000000e+00 : f32
    %13 = vector.broadcast %cst_11 : f32 to vector<8x128xf32>
    %14 = arith.maximumf %12, %13 : vector<8x128xf32>
    %c0_12 = arith.constant 0 : index
    %c0_13 = arith.constant 0 : index
    %15 = vector.load %arg4[%c0_12, %c0_13] : memref<128x128xf32, #tpu.memory_space<vmem>>, vector<128x128xf32>
    %cst_14 = arith.constant dense<0.000000e+00> : vector<8x128xf32>
    %16 = tpu.matmul %14, %15, %cst_14 {dimension_numbers = #tpu.dot_dimension_numbers<[1], [0], [0], [1], [0, 0, 1, 1], [], []>, precision = #tpu.contract_precision<fp32>} : vector<8x128xf32>, vector<128x128xf32>, vector<8x128xf32> -> vector<8x128xf32>
    %c0_15 = arith.constant 0 : index
    %c0_16 = arith.constant 0 : index
    %17 = vector.load %arg7[%c0_15, %c0_16] : memref<1x128xf32, #tpu.memory_space<vmem>>, vector<1x128xf32>
    %18 = vector.broadcast %17 : vector<1x128xf32> to vector<8x128xf32>
    %19 = arith.addf %16, %18 : vector<8x128xf32>
    %c0_17 = arith.constant 0 : index
    %c0_18 = arith.constant 0 : index
    %20 = vector.load %arg8[%c0_17, %c0_18] : memref<8x128xf32, #tpu.memory_space<vmem>>, vector<8x128xf32>
    tpu.vector_store %arg8[%c0_17, %c0_18], %19 {strides = array<i32>} : memref<8x128xf32, #tpu.memory_space<vmem>>, vector<8x128xf32>,
    return
  }
  func.func @transform_0(%arg0: i32) -> (i32, i32) {
    %c0_i32 = arith.constant 0 : i32
    %c0_i32_0 = arith.constant 0 : i32
    return %arg0, %c0_i32 : i32, i32
  }
  func.func @transform_1(%arg0: i32) -> (i32, i32) {
    %c0_i32 = arith.constant 0 : i32
    %c0_i32_0 = arith.constant 0 : i32
    %c0_i32_1 = arith.constant 0 : i32
    return %c0_i32, %c0_i32_0 : i32, i32
  }
  func.func @transform_2(%arg0: i32) -> (i32, i32) {
    %c0_i32 = arith.constant 0 : i32
    %c0_i32_0 = arith.constant 0 : i32
    %c0_i32_1 = arith.constant 0 : i32
    return %c0_i32, %c0_i32_0 : i32, i32
  }
  func.func @transform_3(%arg0: i32) -> (i32, i32) {
    %c0_i32 = arith.constant 0 : i32
    %c0_i32_0 = arith.constant 0 : i32
    %c0_i32_1 = arith.constant 0 : i32
    return %c0_i32, %c0_i32_0 : i32, i32
  }
  func.func @transform_4(%arg0: i32) -> (i32, i32) {
    %c0_i32 = arith.constant 0 : i32
    %c0_i32_0 = arith.constant 0 : i32
    %c0_i32_1 = arith.constant 0 : i32
    return %c0_i32, %c0_i32_0 : i32, i32
  }
  func.func @transform_5(%arg0: i32) -> (i32, i32) {
    %c0_i32 = arith.constant 0 : i32
    %c0_i32_0 = arith.constant 0 : i32
    %c0_i32_1 = arith.constant 0 : i32
    return %c0_i32, %c0_i32_0 : i32, i32
  }
  func.func @transform_6(%arg0: i32) -> (i32, i32) {
    %c0_i32 = arith.constant 0 : i32
    %c0_i32_0 = arith.constant 0 : i32
    %c0_i32_1 = arith.constant 0 : i32
    return %c0_i32, %c0_i32_0 : i32, i32
  }
  func.func @transform_7(%arg0: i32) -> (i32, i32) {
    %c0_i32 = arith.constant 0 : i32
    %c0_i32_0 = arith.constant 0 : i32
    return %arg0, %c0_i32 : i32, i32
  }
}

</mosaic_0001>

<llo_original>
// kernel: tpu_custom_call.1
$region0: #{tpu_custom_call.1}
  #allocation0 [shape = 'u32[]', space=smem, size = 0x4, offset = 0x4, fixed_abs, tag = 'smem constant byte address 0x4 - core index']
  #allocation1 [shape = 'u32[144,128]{1,0:T(1,128)}', space=vmem, size = 0x12000, scoped, tag = 'internal scratch']
  %s0 = inlined_call_operand.hbm [shape: f32[8,128], index: 0, kind: input, shape index: {}]
  %s1 = inlined_call_operand.hbm [shape: f32[128,128], index: 1, kind: input, shape index: {}]
  %s2 = inlined_call_operand.hbm [shape: f32[128,128], index: 2, kind: input, shape index: {}]
  %s3 = inlined_call_operand.hbm [shape: f32[128,128], index: 3, kind: input, shape index: {}]
  %s4 = inlined_call_operand.vmem [shape: f32[1,128], index: 4, kind: input, shape index: {}]
  %s5 = inlined_call_operand.vmem [shape: f32[1,128], index: 5, kind: input, shape index: {}]
  %s6 = inlined_call_operand.vmem [shape: f32[1,128], index: 6, kind: input, shape index: {}]
  %s7 = inlined_call_operand.hbm [shape: f32[8,128], index: 7, kind: output, shape index: {}]
  %s8 = sld [smem:[#allocation0]]
  $region54: #{tpu_custom_call.1} parent=0
    _
  %s10 = ssub.s32 1, %s8
  %s11 = scalar_select 0, %s10, %s8
  $region1: #{tpu_custom_call.1} parent=0
    #allocation2 [shape = 'u8[4096]{0}', space=vmem, size = 0x1000, scoped, tag = 'input window, operand 0, single buffered']
    #allocation3 [shape = 's32[1]{0}', space=sflag, size = 0x4, scoped, tag = 'scoped memory for tpu_custom_call.1']
    #allocation4 [shape = 's32[1]{0}', space=sflag, size = 0x4, scoped, tag = 'scoped memory for tpu_custom_call.1']
    #allocation5 [shape = 'u8[65536]{0}', space=vmem, size = 0x10000, scoped, tag = 'input window, operand 1, single buffered']
    #allocation6 [shape = 's32[1]{0}', space=sflag, size = 0x4, scoped, tag = 'scoped memory for tpu_custom_call.1']
    #allocation7 [shape = 'u8[65536]{0}', space=vmem, size = 0x10000, scoped, tag = 'input window, operand 2, single buffered']
    #allocation8 [shape = 'u8[65536]{0}', space=vmem, size = 0x10000, scoped, tag = 'input window, operand 3, single buffered']
    #allocation9 [shape = 's32[1]{0}', space=sflag, size = 0x4, scoped, tag = 'scoped memory for tpu_custom_call.1']
    #allocation10 [shape = 'u8[4096]{0}', space=vmem, size = 0x1000, scoped, tag = 'output window, operand 0, single buffered']
    %12 = vsyncpa [#allocation3], 0
    %13 = vsyncpa [#allocation6], 0
    %14 = vsyncpa [#allocation9], 0
    %15 = vsyncpa [#allocation4], 0
    // Predicated region
    $region2: #{tpu_custom_call.1} parent=1 // pred_check
      _
    $region3: #{tpu_custom_call.1} parent=1 // pred_check_branch
      %17 = sbr.rel (0) target = $region5
    $region4: #{tpu_custom_call.1} parent=1 // pred_region
      %s19 = ssub.s32 128, 128
      %20 = vsyncadd [#allocation3], %s19
      %s22 = sshll.u32 [#allocation2], 4
      %s23 = int_to_ptr.vmem [resolvable:$true] %s22
      %25 = dma.hbm_to_vmem [thread:$0]  %s0, 128, %s23, [#allocation3]
    $region5: #{tpu_custom_call.1} parent=1 // pred_fallthru
      _
    // Predicated region
    $region6: #{tpu_custom_call.1} parent=1 // pred_check
      _
    $region7: #{tpu_custom_call.1} parent=1 // pred_check_branch
      %27 = sbr.rel (0) target = $region9
    $region8: #{tpu_custom_call.1} parent=1 // pred_region
      %s29 = ssub.s32 2048, 2048
      %30 = vsyncadd [#allocation6], %s29
      %s31 = sshll.u32 [#allocation5], 4
      %s32 = int_to_ptr.vmem [resolvable:$true] %s31
      %37 = dma.hbm_to_vmem [thread:$0]  %s1, 2048, %s32, [#allocation6], 128, 128, 8
    $region9: #{tpu_custom_call.1} parent=1 // pred_fallthru
      _
    // Predicated region
    $region10: #{tpu_custom_call.1} parent=1 // pred_check
      _
    $region11: #{tpu_custom_call.1} parent=1 // pred_check_branch
      %39 = sbr.rel (0) target = $region13
    $region12: #{tpu_custom_call.1} parent=1 // pred_region
      %s41 = ssub.s32 2048, 2048
      %42 = vsyncadd [#allocation6], %s41
      %s43 = sshll.u32 [#allocation7], 4
      %s44 = int_to_ptr.vmem [resolvable:$true] %s43
      %49 = dma.hbm_to_vmem [thread:$0]  %s2, 2048, %s44, [#allocation6], 128, 128, 8
    $region13: #{tpu_custom_call.1} parent=1 // pred_fallthru
      _
    // Predicated region
    $region14: #{tpu_custom_call.1} parent=1 // pred_check
      _
    $region15: #{tpu_custom_call.1} parent=1 // pred_check_branch
      %51 = sbr.rel (0) target = $region17
    $region16: #{tpu_custom_call.1} parent=1 // pred_region
      %s53 = ssub.s32 2048, 2048
      %54 = vsyncadd [#allocation9], %s53
      %s55 = sshll.u32 [#allocation8], 4
      %s56 = int_to_ptr.vmem [resolvable:$true] %s55
      %61 = dma.hbm_to_vmem [thread:$0]  %s3, 2048, %s56, [#allocation9], 128, 128, 8
    $region17: #{tpu_custom_call.1} parent=1 // pred_fallthru
      _
    // Predicated region
    $region18: #{tpu_custom_call.1} parent=1 // pred_check
      _
    $region19: #{tpu_custom_call.1} parent=1 // pred_check_branch
      %63 = sbr.rel (0) target = $region21
    $region20: #{tpu_custom_call.1} parent=1 // pred_region
      _
    $region21: #{tpu_custom_call.1} parent=1 // pred_fallthru
      _
    // Predicated region
    $region22: #{tpu_custom_call.1} parent=1 // pred_check
      _
    $region23: #{tpu_custom_call.1} parent=1 // pred_check_branch
      %65 = sbr.rel (0) target = $region25
    $region24: #{tpu_custom_call.1} parent=1 // pred_region
      _
    $region25: #{tpu_custom_call.1} parent=1 // pred_fallthru
      _
    // Predicated region
    $region26: #{tpu_custom_call.1} parent=1 // pred_check
      _
    $region27: #{tpu_custom_call.1} parent=1 // pred_check_branch
      %67 = sbr.rel (0) target = $region29
    $region28: #{tpu_custom_call.1} parent=1 // pred_region
      _
    $region29: #{tpu_custom_call.1} parent=1 // pred_fallthru
      _
    // Predicated region
    $region30: #{tpu_custom_call.1} parent=1 // pred_check
      _
    $region31: #{tpu_custom_call.1} parent=1 // pred_check_branch
      %69 = sbr.rel (0) target = $region33
    $region32: #{tpu_custom_call.1} parent=1 // pred_region
      %70 = dma.done [#allocation3], 128
    $region33: #{tpu_custom_call.1} parent=1 // pred_fallthru
      _
    // Predicated region
    $region34: #{tpu_custom_call.1} parent=1 // pred_check
      _
    $region35: #{tpu_custom_call.1} parent=1 // pred_check_branch
      %72 = sbr.rel (0) target = $region37
    $region36: #{tpu_custom_call.1} parent=1 // pred_region
      %73 = dma.done [#allocation6], 2048
    $region37: #{tpu_custom_call.1} parent=1 // pred_fallthru
      _
    // Predicated region
    $region38: #{tpu_custom_call.1} parent=1 // pred_check
      _
    $region39: #{tpu_custom_call.1} parent=1 // pred_check_branch
      %75 = sbr.rel (0) target = $region41
    $region40: #{tpu_custom_call.1} parent=1 // pred_region
      %76 = dma.done [#allocation6], 2048
    $region41: #{tpu_custom_call.1} parent=1 // pred_fallthru
      _
    // Predicated region
    $region42: #{tpu_custom_call.1} parent=1 // pred_check
      _
    $region43: #{tpu_custom_call.1} parent=1 // pred_check_branch
      %78 = sbr.rel (0) target = $region45
    $region44: #{tpu_custom_call.1} parent=1 // pred_region
      %79 = dma.done [#allocation9], 2048
    $region45: #{tpu_custom_call.1} parent=1 // pred_fallthru
      _
    %v80 = vld [vmem:[#allocation2] sm:$0xff]
    %v81 = vld [vmem:[#allocation5] sm:$0xff]
    %v82 = vld [vmem:[#allocation5 + $0x8] sm:$0xff]
    %v83 = vld [vmem:[#allocation5 + $0x10] sm:$0xff]
    %v84 = vld [vmem:[#allocation5 + $0x18] sm:$0xff]
    %v85 = vld [vmem:[#allocation5 + $0x20] sm:$0xff]
    %v86 = vld [vmem:[#allocation5 + $0x28] sm:$0xff]
    %v87 = vld [vmem:[#allocation5 + $0x30] sm:$0xff]
    %v88 = vld [vmem:[#allocation5 + $0x38] sm:$0xff]
    %v89 = vld [vmem:[#allocation5 + $0x40] sm:$0xff]
    %v90 = vld [vmem:[#allocation5 + $0x48] sm:$0xff]
    %v91 = vld [vmem:[#allocation5 + $0x50] sm:$0xff]
    %v92 = vld [vmem:[#allocation5 + $0x58] sm:$0xff]
    %v93 = vld [vmem:[#allocation5 + $0x60] sm:$0xff]
    %v94 = vld [vmem:[#allocation5 + $0x68] sm:$0xff]
    %v95 = vld [vmem:[#allocation5 + $0x70] sm:$0xff]
    %v96 = vld [vmem:[#allocation5 + $0x78] sm:$0xff]
    %v97 = vld [vmem:[%s4] sm:$0x1]
    %v99 = vlaneseq
    %v100 = vshrl.u32 %v99, 7
    %v101 = vsub.s32 0, %v100
    %v102 = vrot.slane %v97, %v101
    %104 = vmatprep.subr.mxu0 0.0
    %v105 = vand.u32 %v96, 4294901760
    %106 = vmatpush1.msra.mxu0 %v105
    %107 = vmatprep.subr.mxu0 0.0
    %v108 = vand.u32 %v95, 4294901760
    %109 = vmatpush1.msra.mxu0 %v108
    %110 = vmatprep.subr.mxu0 0.0
    %v111 = vand.u32 %v94, 4294901760
    %112 = vmatpush1.msra.mxu0 %v111
    %113 = vmatprep.subr.mxu0 0.0
    %v114 = vand.u32 %v93, 4294901760
    %115 = vmatpush1.msra.mxu0 %v114
    %116 = vmatprep.subr.mxu0 0.0
    %v117 = vand.u32 %v92, 4294901760
    %118 = vmatpush1.msra.mxu0 %v117
    %119 = vmatprep.subr.mxu0 0.0
    %v120 = vand.u32 %v91, 4294901760
    %121 = vmatpush1.msra.mxu0 %v120
    %122 = vmatprep.subr.mxu0 0.0
    %v123 = vand.u32 %v90, 4294901760
    %124 = vmatpush1.msra.mxu0 %v123
    %125 = vmatprep.subr.mxu0 0.0
    %v126 = vand.u32 %v89, 4294901760
    %127 = vmatpush1.msra.mxu0 %v126
    %128 = vmatprep.subr.mxu0 0.0
    %v129 = vand.u32 %v88, 4294901760
    %130 = vmatpush1.msra.mxu0 %v129
    %131 = vmatprep.subr.mxu0 0.0
    %v132 = vand.u32 %v87, 4294901760
    %133 = vmatpush1.msra.mxu0 %v132
    %134 = vmatprep.subr.mxu0 0.0
    %v135 = vand.u32 %v86, 4294901760
    %136 = vmatpush1.msra.mxu0 %v135
    %137 = vmatprep.subr.mxu0 0.0
    %v138 = vand.u32 %v85, 4294901760
    %139 = vmatpush1.msra.mxu0 %v138
    %140 = vmatprep.subr.mxu0 0.0
    %v141 = vand.u32 %v84, 4294901760
    %142 = vmatpush1.msra.mxu0 %v141
    %143 = vmatprep.subr.mxu0 0.0
    %v144 = vand.u32 %v83, 4294901760
    %145 = vmatpush1.msra.mxu0 %v144
    %146 = vmatprep.subr.mxu0 0.0
    %v147 = vand.u32 %v82, 4294901760
    %148 = vmatpush1.msra.mxu0 %v147
    %149 = vmatprep.subr.mxu0 0.0
    %v150 = vand.u32 %v81, 4294901760
    %151 = vmatpush1.msra.mxu0 %v150
    %152 = vmatprep.subr.mxu0 0.0
    %153 = vmatpush2.msra.mxu0 0.0
    %154 = vmatprep.subr.mxu0 0.0
    %155 = vmatpush2.msra.mxu0 0.0
    %156 = vmatprep.subr.mxu0 0.0
    %157 = vmatpush2.msra.mxu0 0.0
    %158 = vmatprep.subr.mxu0 0.0
    %159 = vmatpush2.msra.mxu0 0.0
    %160 = vmatprep.subr.mxu0 0.0
    %161 = vmatpush2.msra.mxu0 0.0
    %162 = vmatprep.subr.mxu0 0.0
    %163 = vmatpush2.msra.mxu0 0.0
    %164 = vmatprep.subr.mxu0 0.0
    %165 = vmatpush2.msra.mxu0 0.0
    %166 = vmatprep.subr.mxu0 0.0
    %167 = vmatpush2.msra.mxu0 0.0
    %168 = vmatprep.subr.mxu0 0.0
    %169 = vmatpush2.msra.mxu0 0.0
    %170 = vmatprep.subr.mxu0 0.0
    %171 = vmatpush2.msra.mxu0 0.0
    %172 = vmatprep.subr.mxu0 0.0
    %173 = vmatpush2.msra.mxu0 0.0
    %174 = vmatprep.subr.mxu0 0.0
    %175 = vmatpush2.msra.mxu0 0.0
    %176 = vmatprep.subr.mxu0 0.0
    %177 = vmatpush2.msra.mxu0 0.0
    %178 = vmatprep.subr.mxu0 0.0
    %179 = vmatpush2.msra.mxu0 0.0
    %180 = vmatprep.subr.mxu0 0.0
    %181 = vmatpush2.msra.mxu0 0.0
    %182 = vmatprep.subr.mxu0 0.0
    %183 = vmatpush2.msra.mxu0 0.0
    %184 = vmatprep.mubr.f32.mxu0 0.0
    %v185 = vand.u32 %v80, 4294901760
    %v186 = vsub.f32 %v80, %v185
    %v187 = vand.u32 %v186, 4294901760
    %v188 = vsub.f32 %v186, %v187
    %v189 = vand.u32 %v188, 4294901760
    %190 = vmatmul.mubr.f32.gmra.mxu0 %v189
    %v191 = vpop.f32.mrf.mxu0
    %v192 = vadd.f32 %v102, %v191
    %v193 = vpop.f32.mrf.mxu0
    %194 = vdwg.mxu0
    %195 = vmatprep.subr.mxu0 0.0
    %v196 = vand.u32 %v96, 4294901760
    %v197 = vsub.f32 %v96, %v196
    %v198 = vand.u32 %v197, 4294901760
    %v199 = vsub.f32 %v197, %v198
    %v200 = vand.u32 %v199, 4294901760
    %201 = vmatpush1.msra.mxu0 %v200
    %202 = vmatprep.subr.mxu0 0.0
    %v203 = vand.u32 %v95, 4294901760
    %v204 = vsub.f32 %v95, %v203
    %v205 = vand.u32 %v204, 4294901760
    %v206 = vsub.f32 %v204, %v205
    %v207 = vand.u32 %v206, 4294901760
    %208 = vmatpush1.msra.mxu0 %v207
    %209 = vmatprep.subr.mxu0 0.0
    %v210 = vand.u32 %v94, 4294901760
    %v211 = vsub.f32 %v94, %v210
    %v212 = vand.u32 %v211, 4294901760
    %v213 = vsub.f32 %v211, %v212
    %v214 = vand.u32 %v213, 4294901760
    %215 = vmatpush1.msra.mxu0 %v214
    %216 = vmatprep.subr.mxu0 0.0
    %v217 = vand.u32 %v93, 4294901760
    %v218 = vsub.f32 %v93, %v217
    %v219 = vand.u32 %v218, 4294901760
    %v220 = vsub.f32 %v218, %v219
    %v221 = vand.u32 %v220, 4294901760
    %222 = vmatpush1.msra.mxu0 %v221
    %223 = vmatprep.subr.mxu0 0.0
    %v224 = vand.u32 %v92, 4294901760
    %v225 = vsub.f32 %v92, %v224
    %v226 = vand.u32 %v225, 4294901760
    %v227 = vsub.f32 %v225, %v226
    %v228 = vand.u32 %v227, 4294901760
    %229 = vmatpush1.msra.mxu0 %v228
    %230 = vmatprep.subr.mxu0 0.0
    %v231 = vand.u32 %v91, 4294901760
    %v232 = vsub.f32 %v91, %v231
    %v233 = vand.u32 %v232, 4294901760
    %v234 = vsub.f32 %v232, %v233
    %v235 = vand.u32 %v234, 4294901760
    %236 = vmatpush1.msra.mxu0 %v235
    %237 = vmatprep.subr.mxu0 0.0
    %v238 = vand.u32 %v90, 4294901760
    %v239 = vsub.f32 %v90, %v238
    %v240 = vand.u32 %v239, 4294901760
    %v241 = vsub.f32 %v239, %v240
    %v242 = vand.u32 %v241, 4294901760
    %243 = vmatpush1.msra.mxu0 %v242
    %244 = vmatprep.subr.mxu0 0.0
    %v245 = vand.u32 %v89, 4294901760
    %v246 = vsub.f32 %v89, %v245
    %v247 = vand.u32 %v246, 4294901760
    %v248 = vsub.f32 %v246, %v247
    %v249 = vand.u32 %v248, 4294901760
    %250 = vmatpush1.msra.mxu0 %v249
    %251 = vmatprep.subr.mxu0 0.0
    %v252 = vand.u32 %v88, 4294901760
    %v253 = vsub.f32 %v88, %v252
    %v254 = vand.u32 %v253, 4294901760
    %v255 = vsub.f32 %v253, %v254
    %v256 = vand.u32 %v255, 4294901760
    %257 = vmatpush1.msra.mxu0 %v256
    %258 = vmatprep.subr.mxu0 0.0
    %v259 = vand.u32 %v87, 4294901760
    %v260 = vsub.f32 %v87, %v259
    %v261 = vand.u32 %v260, 4294901760
    %v262 = vsub.f32 %v260, %v261
    %v263 = vand.u32 %v262, 4294901760
    %264 = vmatpush1.msra.mxu0 %v263
    %265 = vmatprep.subr.mxu0 0.0
    %v266 = vand.u32 %v86, 4294901760
    %v267 = vsub.f32 %v86, %v266
    %v268 = vand.u32 %v267, 4294901760
    %v269 = vsub.f32 %v267, %v268
    %v270 = vand.u32 %v269, 4294901760
    %271 = vmatpush1.msra.mxu0 %v270
    %272 = vmatprep.subr.mxu0 0.0
    %v273 = vand.u32 %v85, 4294901760
    %v274 = vsub.f32 %v85, %v273
    %v275 = vand.u32 %v274, 4294901760
    %v276 = vsub.f32 %v274, %v275
    %v277 = vand.u32 %v276, 4294901760
    %278 = vmatpush1.msra.mxu0 %v277
    %279 = vmatprep.subr.mxu0 0.0
    %v280 = vand.u32 %v84, 4294901760
    %v281 = vsub.f32 %v84, %v280
    %v282 = vand.u32 %v281, 4294901760
    %v283 = vsub.f32 %v281, %v282
    %v284 = vand.u32 %v283, 4294901760
    %285 = vmatpush1.msra.mxu0 %v284
    %286 = vmatprep.subr.mxu0 0.0
    %v287 = vand.u32 %v83, 4294901760
    %v288 = vsub.f32 %v83, %v287
    %v289 = vand.u32 %v288, 4294901760
    %v290 = vsub.f32 %v288, %v289
    %v291 = vand.u32 %v290, 4294901760
    %292 = vmatpush1.msra.mxu0 %v291
    %293 = vmatprep.subr.mxu0 0.0
    %v294 = vand.u32 %v82, 4294901760
    %v295 = vsub.f32 %v82, %v294
    %v296 = vand.u32 %v295, 4294901760
    %v297 = vsub.f32 %v295, %v296
    %v298 = vand.u32 %v297, 4294901760
    %299 = vmatpush1.msra.mxu0 %v298
    %300 = vmatprep.subr.mxu0 0.0
    %v301 = vand.u32 %v81, 4294901760
    %v302 = vsub.f32 %v81, %v301
    %v303 = vand.u32 %v302, 4294901760
    %v304 = vsub.f32 %v302, %v303
    %v305 = vand.u32 %v304, 4294901760
    %306 = vmatpush1.msra.mxu0 %v305
    %307 = vmatprep.subr.mxu0 0.0
    %308 = vmatpush2.msra.mxu0 0.0
    %309 = vmatprep.subr.mxu0 0.0
    %310 = vmatpush2.msra.mxu0 0.0
    %311 = vmatprep.subr.mxu0 0.0
    %312 = vmatpush2.msra.mxu0 0.0
    %313 = vmatprep.subr.mxu0 0.0
    %314 = vmatpush2.msra.mxu0 0.0
    %315 = vmatprep.subr.mxu0 0.0
    %316 = vmatpush2.msra.mxu0 0.0
    %317 = vmatprep.subr.mxu0 0.0
    %318 = vmatpush2.msra.mxu0 0.0
    %319 = vmatprep.subr.mxu0 0.0
    %320 = vmatpush2.msra.mxu0 0.0
    %321 = vmatprep.subr.mxu0 0.0
    %322 = vmatpush2.msra.mxu0 0.0
    %323 = vmatprep.subr.mxu0 0.0
    %324 = vmatpush2.msra.mxu0 0.0
    %325 = vmatprep.subr.mxu0 0.0
    %326 = vmatpush2.msra.mxu0 0.0
    %327 = vmatprep.subr.mxu0 0.0
    %328 = vmatpush2.msra.mxu0 0.0
    %329 = vmatprep.subr.mxu0 0.0
    %330 = vmatpush2.msra.mxu0 0.0
    %331 = vmatprep.subr.mxu0 0.0
    %332 = vmatpush2.msra.mxu0 0.0
    %333 = vmatprep.subr.mxu0 0.0
    %334 = vmatpush2.msra.mxu0 0.0
    %335 = vmatprep.subr.mxu0 0.0
    %336 = vmatpush2.msra.mxu0 0.0
    %337 = vmatprep.subr.mxu0 0.0
    %338 = vmatpush2.msra.mxu0 0.0
    %339 = vmatprep.mubr.f32.mxu0 0.0
    %v340 = vand.u32 %v80, 4294901760
    %341 = vmatmul.mubr.f32.gmra.mxu0 %v340
    %v342 = vpop.f32.mrf.mxu0
    %v343 = vadd.f32 %v192, %v342
    %v344 = vpop.f32.mrf.mxu0
    %345 = vdwg.mxu0
    %346 = vmatprep.subr.mxu0 0.0
    %v347 = vand.u32 %v96, 4294901760
    %v348 = vsub.f32 %v96, %v347
    %349 = vmatpush1.msra.mxu0 %v348
    %350 = vmatprep.subr.mxu0 0.0
    %v351 = vand.u32 %v95, 4294901760
    %v352 = vsub.f32 %v95, %v351
    %353 = vmatpush1.msra.mxu0 %v352
    %354 = vmatprep.subr.mxu0 0.0
    %v355 = vand.u32 %v94, 4294901760
    %v356 = vsub.f32 %v94, %v355
    %357 = vmatpush1.msra.mxu0 %v356
    %358 = vmatprep.subr.mxu0 0.0
    %v359 = vand.u32 %v93, 4294901760
    %v360 = vsub.f32 %v93, %v359
    %361 = vmatpush1.msra.mxu0 %v360
    %362 = vmatprep.subr.mxu0 0.0
    %v363 = vand.u32 %v92, 4294901760
    %v364 = vsub.f32 %v92, %v363
    %365 = vmatpush1.msra.mxu0 %v364
    %366 = vmatprep.subr.mxu0 0.0
    %v367 = vand.u32 %v91, 4294901760
    %v368 = vsub.f32 %v91, %v367
    %369 = vmatpush1.msra.mxu0 %v368
    %370 = vmatprep.subr.mxu0 0.0
    %v371 = vand.u32 %v90, 4294901760
    %v372 = vsub.f32 %v90, %v371
    %373 = vmatpush1.msra.mxu0 %v372
    %374 = vmatprep.subr.mxu0 0.0
    %v375 = vand.u32 %v89, 4294901760
    %v376 = vsub.f32 %v89, %v375
    %377 = vmatpush1.msra.mxu0 %v376
    %378 = vmatprep.subr.mxu0 0.0
    %v379 = vand.u32 %v88, 4294901760
    %v380 = vsub.f32 %v88, %v379
    %381 = vmatpush1.msra.mxu0 %v380
    %382 = vmatprep.subr.mxu0 0.0
    %v383 = vand.u32 %v87, 4294901760
    %v384 = vsub.f32 %v87, %v383
    %385 = vmatpush1.msra.mxu0 %v384
    %386 = vmatprep.subr.mxu0 0.0
    %v387 = vand.u32 %v86, 4294901760
    %v388 = vsub.f32 %v86, %v387
    %389 = vmatpush1.msra.mxu0 %v388
    %390 = vmatprep.subr.mxu0 0.0
    %v391 = vand.u32 %v85, 4294901760
    %v392 = vsub.f32 %v85, %v391
    %393 = vmatpush1.msra.mxu0 %v392
    %394 = vmatprep.subr.mxu0 0.0
    %v395 = vand.u32 %v84, 4294901760
    %v396 = vsub.f32 %v84, %v395
    %397 = vmatpush1.msra.mxu0 %v396
    %398 = vmatprep.subr.mxu0 0.0
    %v399 = vand.u32 %v83, 4294901760
    %v400 = vsub.f32 %v83, %v399
    %401 = vmatpush1.msra.mxu0 %v400
    %402 = vmatprep.subr.mxu0 0.0
    %v403 = vand.u32 %v82, 4294901760
    %v404 = vsub.f32 %v82, %v403
    %405 = vmatpush1.msra.mxu0 %v404
    %406 = vmatprep.subr.mxu0 0.0
    %v407 = vand.u32 %v81, 4294901760
    %v408 = vsub.f32 %v81, %v407
    %409 = vmatpush1.msra.mxu0 %v408
    %410 = vmatprep.subr.mxu0 0.0
    %411 = vmatpush2.msra.mxu0 0.0
    %412 = vmatprep.subr.mxu0 0.0
    %413 = vmatpush2.msra.mxu0 0.0
    %414 = vmatprep.subr.mxu0 0.0
    %415 = vmatpush2.msra.mxu0 0.0
    %416 = vmatprep.subr.mxu0 0.0
    %417 = vmatpush2.msra.mxu0 0.0
    %418 = vmatprep.subr.mxu0 0.0
    %419 = vmatpush2.msra.mxu0 0.0
    %420 = vmatprep.subr.mxu0 0.0
    %421 = vmatpush2.msra.mxu0 0.0
    %422 = vmatprep.subr.mxu0 0.0
    %423 = vmatpush2.msra.mxu0 0.0
    %424 = vmatprep.subr.mxu0 0.0
    %425 = vmatpush2.msra.mxu0 0.0
    %426 = vmatprep.subr.mxu0 0.0
    %427 = vmatpush2.msra.mxu0 0.0
    %428 = vmatprep.subr.mxu0 0.0
    %429 = vmatpush2.msra.mxu0 0.0
    %430 = vmatprep.subr.mxu0 0.0
    %431 = vmatpush2.msra.mxu0 0.0
    %432 = vmatprep.subr.mxu0 0.0
    %433 = vmatpush2.msra.mxu0 0.0
    %434 = vmatprep.subr.mxu0 0.0
    %435 = vmatpush2.msra.mxu0 0.0
    %436 = vmatprep.subr.mxu0 0.0
    %437 = vmatpush2.msra.mxu0 0.0
    %438 = vmatprep.subr.mxu0 0.0
    %439 = vmatpush2.msra.mxu0 0.0
    %440 = vmatprep.subr.mxu0 0.0
    %441 = vmatpush2.msra.mxu0 0.0
    %442 = vmatprep.mubr.f32.mxu0 0.0
    %v443 = vand.u32 %v80, 4294901760
    %v444 = vsub.f32 %v80, %v443
    %445 = vmatmul.mubr.f32.gmra.mxu0 %v444
    %v446 = vpop.f32.mrf.mxu0
    %v447 = vadd.f32 %v343, %v446
    %v448 = vpop.f32.mrf.mxu0
    %449 = vdwg.mxu0
    %450 = vmatprep.subr.mxu0 0.0
    %v451 = vand.u32 %v96, 4294901760
    %452 = vmatpush1.msra.mxu0 %v451
    %453 = vmatprep.subr.mxu0 0.0
    %v454 = vand.u32 %v95, 4294901760
    %455 = vmatpush1.msra.mxu0 %v454
    %456 = vmatprep.subr.mxu0 0.0
    %v457 = vand.u32 %v94, 4294901760
    %458 = vmatpush1.msra.mxu0 %v457
    %459 = vmatprep.subr.mxu0 0.0
    %v460 = vand.u32 %v93, 4294901760
    %461 = vmatpush1.msra.mxu0 %v460
    %462 = vmatprep.subr.mxu0 0.0
    %v463 = vand.u32 %v92, 4294901760
    %464 = vmatpush1.msra.mxu0 %v463
    %465 = vmatprep.subr.mxu0 0.0
    %v466 = vand.u32 %v91, 4294901760
    %467 = vmatpush1.msra.mxu0 %v466
    %468 = vmatprep.subr.mxu0 0.0
    %v469 = vand.u32 %v90, 4294901760
    %470 = vmatpush1.msra.mxu0 %v469
    %471 = vmatprep.subr.mxu0 0.0
    %v472 = vand.u32 %v89, 4294901760
    %473 = vmatpush1.msra.mxu0 %v472
    %474 = vmatprep.subr.mxu0 0.0
    %v475 = vand.u32 %v88, 4294901760
    %476 = vmatpush1.msra.mxu0 %v475
    %477 = vmatprep.subr.mxu0 0.0
    %v478 = vand.u32 %v87, 4294901760
    %479 = vmatpush1.msra.mxu0 %v478
    %480 = vmatprep.subr.mxu0 0.0
    %v481 = vand.u32 %v86, 4294901760
    %482 = vmatpush1.msra.mxu0 %v481
    %483 = vmatprep.subr.mxu0 0.0
    %v484 = vand.u32 %v85, 4294901760
    %485 = vmatpush1.msra.mxu0 %v484
    %486 = vmatprep.subr.mxu0 0.0
    %v487 = vand.u32 %v84, 4294901760
    %488 = vmatpush1.msra.mxu0 %v487
    %489 = vmatprep.subr.mxu0 0.0
    %v490 = vand.u32 %v83, 4294901760
    %491 = vmatpush1.msra.mxu0 %v490
    %492 = vmatprep.subr.mxu0 0.0
    %v493 = vand.u32 %v82, 4294901760
    %494 = vmatpush1.msra.mxu0 %v493
    %495 = vmatprep.subr.mxu0 0.0
    %v496 = vand.u32 %v81, 4294901760
    %497 = vmatpush1.msra.mxu0 %v496
    %498 = vmatprep.subr.mxu0 0.0
    %499 = vmatpush2.msra.mxu0 0.0
    %500 = vmatprep.subr.mxu0 0.0
    %501 = vmatpush2.msra.mxu0 0.0
    %502 = vmatprep.subr.mxu0 0.0
    %503 = vmatpush2.msra.mxu0 0.0
    %504 = vmatprep.subr.mxu0 0.0
    %505 = vmatpush2.msra.mxu0 0.0
    %506 = vmatprep.subr.mxu0 0.0
    %507 = vmatpush2.msra.mxu0 0.0
    %508 = vmatprep.subr.mxu0 0.0
    %509 = vmatpush2.msra.mxu0 0.0
    %510 = vmatprep.subr.mxu0 0.0
    %511 = vmatpush2.msra.mxu0 0.0
    %512 = vmatprep.subr.mxu0 0.0
    %513 = vmatpush2.msra.mxu0 0.0
    %514 = vmatprep.subr.mxu0 0.0
    %515 = vmatpush2.msra.mxu0 0.0
    %516 = vmatprep.subr.mxu0 0.0
    %517 = vmatpush2.msra.mxu0 0.0
    %518 = vmatprep.subr.mxu0 0.0
    %519 = vmatpush2.msra.mxu0 0.0
    %520 = vmatprep.subr.mxu0 0.0
    %521 = vmatpush2.msra.mxu0 0.0
    %522 = vmatprep.subr.mxu0 0.0
    %523 = vmatpush2.msra.mxu0 0.0
    %524 = vmatprep.subr.mxu0 0.0
    %525 = vmatpush2.msra.mxu0 0.0
    %526 = vmatprep.subr.mxu0 0.0
    %527 = vmatpush2.msra.mxu0 0.0
    %528 = vmatprep.subr.mxu0 0.0
    %529 = vmatpush2.msra.mxu0 0.0
    %530 = vmatprep.mubr.f32.mxu0 0.0
    %v531 = vand.u32 %v80, 4294901760
    %v532 = vsub.f32 %v80, %v531
    %v533 = vand.u32 %v532, 4294901760
    %534 = vmatmul.mubr.f32.gmra.mxu0 %v533
    %v535 = vpop.f32.mrf.mxu0
    %v536 = vadd.f32 %v447, %v535
    %v537 = vpop.f32.mrf.mxu0
    %538 = vdwg.mxu0
    %539 = vmatprep.subr.mxu0 0.0
    %v540 = vand.u32 %v96, 4294901760
    %v541 = vsub.f32 %v96, %v540
    %v542 = vand.u32 %v541, 4294901760
    %543 = vmatpush1.msra.mxu0 %v542
    %544 = vmatprep.subr.mxu0 0.0
    %v545 = vand.u32 %v95, 4294901760
    %v546 = vsub.f32 %v95, %v545
    %v547 = vand.u32 %v546, 4294901760
    %548 = vmatpush1.msra.mxu0 %v547
    %549 = vmatprep.subr.mxu0 0.0
    %v550 = vand.u32 %v94, 4294901760
    %v551 = vsub.f32 %v94, %v550
    %v552 = vand.u32 %v551, 4294901760
    %553 = vmatpush1.msra.mxu0 %v552
    %554 = vmatprep.subr.mxu0 0.0
    %v555 = vand.u32 %v93, 4294901760
    %v556 = vsub.f32 %v93, %v555
    %v557 = vand.u32 %v556, 4294901760
    %558 = vmatpush1.msra.mxu0 %v557
    %559 = vmatprep.subr.mxu0 0.0
    %v560 = vand.u32 %v92, 4294901760
    %v561 = vsub.f32 %v92, %v560
    %v562 = vand.u32 %v561, 4294901760
    %563 = vmatpush1.msra.mxu0 %v562
    %564 = vmatprep.subr.mxu0 0.0
    %v565 = vand.u32 %v91, 4294901760
    %v566 = vsub.f32 %v91, %v565
    %v567 = vand.u32 %v566, 4294901760
    %568 = vmatpush1.msra.mxu0 %v567
    %569 = vmatprep.subr.mxu0 0.0
    %v570 = vand.u32 %v90, 4294901760
    %v571 = vsub.f32 %v90, %v570
    %v572 = vand.u32 %v571, 4294901760
    %573 = vmatpush1.msra.mxu0 %v572
    %574 = vmatprep.subr.mxu0 0.0
    %v575 = vand.u32 %v89, 4294901760
    %v576 = vsub.f32 %v89, %v575
    %v577 = vand.u32 %v576, 4294901760
    %578 = vmatpush1.msra.mxu0 %v577
    %579 = vmatprep.subr.mxu0 0.0
    %v580 = vand.u32 %v88, 4294901760
    %v581 = vsub.f32 %v88, %v580
    %v582 = vand.u32 %v581, 4294901760
    %583 = vmatpush1.msra.mxu0 %v582
    %584 = vmatprep.subr.mxu0 0.0
    %v585 = vand.u32 %v87, 4294901760
    %v586 = vsub.f32 %v87, %v585
    %v587 = vand.u32 %v586, 4294901760
    %588 = vmatpush1.msra.mxu0 %v587
    %589 = vmatprep.subr.mxu0 0.0
    %v590 = vand.u32 %v86, 4294901760
    %v591 = vsub.f32 %v86, %v590
    %v592 = vand.u32 %v591, 4294901760
    %593 = vmatpush1.msra.mxu0 %v592
    %594 = vmatprep.subr.mxu0 0.0
    %v595 = vand.u32 %v85, 4294901760
    %v596 = vsub.f32 %v85, %v595
    %v597 = vand.u32 %v596, 4294901760
    %598 = vmatpush1.msra.mxu0 %v597
    %599 = vmatprep.subr.mxu0 0.0
    %v600 = vand.u32 %v84, 4294901760
    %v601 = vsub.f32 %v84, %v600
    %v602 = vand.u32 %v601, 4294901760
    %603 = vmatpush1.msra.mxu0 %v602
    %604 = vmatprep.subr.mxu0 0.0
    %v605 = vand.u32 %v83, 4294901760
    %v606 = vsub.f32 %v83, %v605
    %v607 = vand.u32 %v606, 4294901760
    %608 = vmatpush1.msra.mxu0 %v607
    %609 = vmatprep.subr.mxu0 0.0
    %v610 = vand.u32 %v82, 4294901760
    %v611 = vsub.f32 %v82, %v610
    %v612 = vand.u32 %v611, 4294901760
    %613 = vmatpush1.msra.mxu0 %v612
    %614 = vmatprep.subr.mxu0 0.0
    %v615 = vand.u32 %v81, 4294901760
    %v616 = vsub.f32 %v81, %v615
    %v617 = vand.u32 %v616, 4294901760
    %618 = vmatpush1.msra.mxu0 %v617
    %619 = vmatprep.subr.mxu0 0.0
    %620 = vmatpush2.msra.mxu0 0.0
    %621 = vmatprep.subr.mxu0 0.0
    %622 = vmatpush2.msra.mxu0 0.0
    %623 = vmatprep.subr.mxu0 0.0
    %624 = vmatpush2.msra.mxu0 0.0
    %625 = vmatprep.subr.mxu0 0.0
    %626 = vmatpush2.msra.mxu0 0.0
    %627 = vmatprep.subr.mxu0 0.0
    %628 = vmatpush2.msra.mxu0 0.0
    %629 = vmatprep.subr.mxu0 0.0
    %630 = vmatpush2.msra.mxu0 0.0
    %631 = vmatprep.subr.mxu0 0.0
    %632 = vmatpush2.msra.mxu0 0.0
    %633 = vmatprep.subr.mxu0 0.0
    %634 = vmatpush2.msra.mxu0 0.0
    %635 = vmatprep.subr.mxu0 0.0
    %636 = vmatpush2.msra.mxu0 0.0
    %637 = vmatprep.subr.mxu0 0.0
    %638 = vmatpush2.msra.mxu0 0.0
    %639 = vmatprep.subr.mxu0 0.0
    %640 = vmatpush2.msra.mxu0 0.0
    %641 = vmatprep.subr.mxu0 0.0
    %642 = vmatpush2.msra.mxu0 0.0
    %643 = vmatprep.subr.mxu0 0.0
    %644 = vmatpush2.msra.mxu0 0.0
    %645 = vmatprep.subr.mxu0 0.0
    %646 = vmatpush2.msra.mxu0 0.0
    %647 = vmatprep.subr.mxu0 0.0
    %648 = vmatpush2.msra.mxu0 0.0
    %649 = vmatprep.subr.mxu0 0.0
    %650 = vmatpush2.msra.mxu0 0.0
    %651 = vmatprep.mubr.f32.mxu0 0.0
    %v652 = vand.u32 %v80, 4294901760
    %653 = vmatmul.mubr.f32.gmra.mxu0 %v652
    %v654 = vpop.f32.mrf.mxu0
    %v655 = vadd.f32 %v536, %v654
    %v656 = vpop.f32.mrf.mxu0
    %657 = vdwg.mxu0
    %658 = vmatprep.subr.mxu0 0.0
    %v659 = vand.u32 %v96, 4294901760
    %660 = vmatpush1.msra.mxu0 %v659
    %661 = vmatprep.subr.mxu0 0.0
    %v662 = vand.u32 %v95, 4294901760
    %663 = vmatpush1.msra.mxu0 %v662
    %664 = vmatprep.subr.mxu0 0.0
    %v665 = vand.u32 %v94, 4294901760
    %666 = vmatpush1.msra.mxu0 %v665
    %667 = vmatprep.subr.mxu0 0.0
    %v668 = vand.u32 %v93, 4294901760
    %669 = vmatpush1.msra.mxu0 %v668
    %670 = vmatprep.subr.mxu0 0.0
    %v671 = vand.u32 %v92, 4294901760
    %672 = vmatpush1.msra.mxu0 %v671
    %673 = vmatprep.subr.mxu0 0.0
    %v674 = vand.u32 %v91, 4294901760
    %675 = vmatpush1.msra.mxu0 %v674
    %676 = vmatprep.subr.mxu0 0.0
    %v677 = vand.u32 %v90, 4294901760
    %678 = vmatpush1.msra.mxu0 %v677
    %679 = vmatprep.subr.mxu0 0.0
    %v680 = vand.u32 %v89, 4294901760
    %681 = vmatpush1.msra.mxu0 %v680
    %682 = vmatprep.subr.mxu0 0.0
    %v683 = vand.u32 %v88, 4294901760
    %684 = vmatpush1.msra.mxu0 %v683
    %685 = vmatprep.subr.mxu0 0.0
    %v686 = vand.u32 %v87, 4294901760
    %687 = vmatpush1.msra.mxu0 %v686
    %688 = vmatprep.subr.mxu0 0.0
    %v689 = vand.u32 %v86, 4294901760
    %690 = vmatpush1.msra.mxu0 %v689
    %691 = vmatprep.subr.mxu0 0.0
    %v692 = vand.u32 %v85, 4294901760
    %693 = vmatpush1.msra.mxu0 %v692
    %694 = vmatprep.subr.mxu0 0.0
    %v695 = vand.u32 %v84, 4294901760
    %696 = vmatpush1.msra.mxu0 %v695
    %697 = vmatprep.subr.mxu0 0.0
    %v698 = vand.u32 %v83, 4294901760
    %699 = vmatpush1.msra.mxu0 %v698
    %700 = vmatprep.subr.mxu0 0.0
    %v701 = vand.u32 %v82, 4294901760
    %702 = vmatpush1.msra.mxu0 %v701
    %703 = vmatprep.subr.mxu0 0.0
    %v704 = vand.u32 %v81, 4294901760
    %705 = vmatpush1.msra.mxu0 %v704
    %706 = vmatprep.subr.mxu0 0.0
    %707 = vmatpush2.msra.mxu0 0.0
    %708 = vmatprep.subr.mxu0 0.0
    %709 = vmatpush2.msra.mxu0 0.0
    %710 = vmatprep.subr.mxu0 0.0
    %711 = vmatpush2.msra.mxu0 0.0
    %712 = vmatprep.subr.mxu0 0.0
    %713 = vmatpush2.msra.mxu0 0.0
    %714 = vmatprep.subr.mxu0 0.0
    %715 = vmatpush2.msra.mxu0 0.0
    %716 = vmatprep.subr.mxu0 0.0
    %717 = vmatpush2.msra.mxu0 0.0
    %718 = vmatprep.subr.mxu0 0.0
    %719 = vmatpush2.msra.mxu0 0.0
    %720 = vmatprep.subr.mxu0 0.0
    %721 = vmatpush2.msra.mxu0 0.0
    %722 = vmatprep.subr.mxu0 0.0
    %723 = vmatpush2.msra.mxu0 0.0
    %724 = vmatprep.subr.mxu0 0.0
    %725 = vmatpush2.msra.mxu0 0.0
    %726 = vmatprep.subr.mxu0 0.0
    %727 = vmatpush2.msra.mxu0 0.0
    %728 = vmatprep.subr.mxu0 0.0
    %729 = vmatpush2.msra.mxu0 0.0
    %730 = vmatprep.subr.mxu0 0.0
    %731 = vmatpush2.msra.mxu0 0.0
    %732 = vmatprep.subr.mxu0 0.0
    %733 = vmatpush2.msra.mxu0 0.0
    %734 = vmatprep.subr.mxu0 0.0
    %735 = vmatpush2.msra.mxu0 0.0
    %736 = vmatprep.subr.mxu0 0.0
    %737 = vmatpush2.msra.mxu0 0.0
    %738 = vmatprep.mubr.f32.mxu0 0.0
    %v739 = vand.u32 %v80, 4294901760
    %740 = vmatmul.mubr.f32.gmra.mxu0 %v739
    %v741 = vpop.f32.mrf.mxu0
    %v742 = vadd.f32 %v655, %v741
    %v743 = vpop.f32.mrf.mxu0
    %744 = vdwg.mxu0
    %v745 = vmax.f32 %v742, 0.0
    %v746 = vld [vmem:[#allocation7] sm:$0xff]
    %v747 = vld [vmem:[#allocation7 + $0x8] sm:$0xff]
    %v748 = vld [vmem:[#allocation7 + $0x10] sm:$0xff]
    %v749 = vld [vmem:[#allocation7 + $0x18] sm:$0xff]
    %v750 = vld [vmem:[#allocation7 + $0x20] sm:$0xff]
    %v751 = vld [vmem:[#allocation7 + $0x28] sm:$0xff]
    %v752 = vld [vmem:[#allocation7 + $0x30] sm:$0xff]
    %v753 = vld [vmem:[#allocation7 + $0x38] sm:$0xff]
    %v754 = vld [vmem:[#allocation7 + $0x40] sm:$0xff]
    %v755 = vld [vmem:[#allocation7 + $0x48] sm:$0xff]
    %v756 = vld [vmem:[#allocation7 + $0x50] sm:$0xff]
    %v757 = vld [vmem:[#allocation7 + $0x58] sm:$0xff]
    %v758 = vld [vmem:[#allocation7 + $0x60] sm:$0xff]
    %v759 = vld [vmem:[#allocation7 + $0x68] sm:$0xff]
    %v760 = vld [vmem:[#allocation7 + $0x70] sm:$0xff]
    %v761 = vld [vmem:[#allocation7 + $0x78] sm:$0xff]
    %v762 = vld [vmem:[%s5] sm:$0x1]
    %v764 = vlaneseq
    %v765 = vshrl.u32 %v764, 7
    %v766 = vsub.s32 0, %v765
    %v767 = vrot.slane %v762, %v766
    %769 = vmatprep.subr.mxu0 0.0
    %v770 = vand.u32 %v761, 4294901760
    %771 = vmatpush1.msra.mxu0 %v770
    %772 = vmatprep.subr.mxu0 0.0
    %v773 = vand.u32 %v760, 4294901760
    %774 = vmatpush1.msra.mxu0 %v773
    %775 = vmatprep.subr.mxu0 0.0
    %v776 = vand.u32 %v759, 4294901760
    %777 = vmatpush1.msra.mxu0 %v776
    %778 = vmatprep.subr.mxu0 0.0
    %v779 = vand.u32 %v758, 4294901760
    %780 = vmatpush1.msra.mxu0 %v779
    %781 = vmatprep.subr.mxu0 0.0
    %v782 = vand.u32 %v757, 4294901760
    %783 = vmatpush1.msra.mxu0 %v782
    %784 = vmatprep.subr.mxu0 0.0
    %v785 = vand.u32 %v756, 4294901760
    %786 = vmatpush1.msra.mxu0 %v785
    %787 = vmatprep.subr.mxu0 0.0
    %v788 = vand.u32 %v755, 4294901760
    %789 = vmatpush1.msra.mxu0 %v788
    %790 = vmatprep.subr.mxu0 0.0
    %v791 = vand.u32 %v754, 4294901760
    %792 = vmatpush1.msra.mxu0 %v791
    %793 = vmatprep.subr.mxu0 0.0
    %v794 = vand.u32 %v753, 4294901760
    %795 = vmatpush1.msra.mxu0 %v794
    %796 = vmatprep.subr.mxu0 0.0
    %v797 = vand.u32 %v752, 4294901760
    %798 = vmatpush1.msra.mxu0 %v797
    %799 = vmatprep.subr.mxu0 0.0
    %v800 = vand.u32 %v751, 4294901760
    %801 = vmatpush1.msra.mxu0 %v800
    %802 = vmatprep.subr.mxu0 0.0
    %v803 = vand.u32 %v750, 4294901760
    %804 = vmatpush1.msra.mxu0 %v803
    %805 = vmatprep.subr.mxu0 0.0
    %v806 = vand.u32 %v749, 4294901760
    %807 = vmatpush1.msra.mxu0 %v806
    %808 = vmatprep.subr.mxu0 0.0
    %v809 = vand.u32 %v748, 4294901760
    %810 = vmatpush1.msra.mxu0 %v809
    %811 = vmatprep.subr.mxu0 0.0
    %v812 = vand.u32 %v747, 4294901760
    %813 = vmatpush1.msra.mxu0 %v812
    %814 = vmatprep.subr.mxu0 0.0
    %v815 = vand.u32 %v746, 4294901760
    %816 = vmatpush1.msra.mxu0 %v815
    %817 = vmatprep.subr.mxu0 0.0
    %818 = vmatpush2.msra.mxu0 0.0
    %819 = vmatprep.subr.mxu0 0.0
    %820 = vmatpush2.msra.mxu0 0.0
    %821 = vmatprep.subr.mxu0 0.0
    %822 = vmatpush2.msra.mxu0 0.0
    %823 = vmatprep.subr.mxu0 0.0
    %824 = vmatpush2.msra.mxu0 0.0
    %825 = vmatprep.subr.mxu0 0.0
    %826 = vmatpush2.msra.mxu0 0.0
    %827 = vmatprep.subr.mxu0 0.0
    %828 = vmatpush2.msra.mxu0 0.0
    %829 = vmatprep.subr.mxu0 0.0
    %830 = vmatpush2.msra.mxu0 0.0
    %831 = vmatprep.subr.mxu0 0.0
    %832 = vmatpush2.msra.mxu0 0.0
    %833 = vmatprep.subr.mxu0 0.0
    %834 = vmatpush2.msra.mxu0 0.0
    %835 = vmatprep.subr.mxu0 0.0
    %836 = vmatpush2.msra.mxu0 0.0
    %837 = vmatprep.subr.mxu0 0.0
    %838 = vmatpush2.msra.mxu0 0.0
    %839 = vmatprep.subr.mxu0 0.0
    %840 = vmatpush2.msra.mxu0 0.0
    %841 = vmatprep.subr.mxu0 0.0
    %842 = vmatpush2.msra.mxu0 0.0
    %843 = vmatprep.subr.mxu0 0.0
    %844 = vmatpush2.msra.mxu0 0.0
    %845 = vmatprep.subr.mxu0 0.0
    %846 = vmatpush2.msra.mxu0 0.0
    %847 = vmatprep.subr.mxu0 0.0
    %848 = vmatpush2.msra.mxu0 0.0
    %849 = vmatprep.mubr.f32.mxu0 0.0
    %v850 = vand.u32 %v745, 4294901760
    %v851 = vsub.f32 %v745, %v850
    %v852 = vand.u32 %v851, 4294901760
    %v853 = vsub.f32 %v851, %v852
    %v854 = vand.u32 %v853, 4294901760
    %855 = vmatmul.mubr.f32.gmra.mxu0 %v854
    %v856 = vpop.f32.mrf.mxu0
    %v857 = vadd.f32 %v767, %v856
    %v858 = vpop.f32.mrf.mxu0
    %859 = vdwg.mxu0
    %860 = vmatprep.subr.mxu0 0.0
    %v861 = vand.u32 %v761, 4294901760
    %v862 = vsub.f32 %v761, %v861
    %v863 = vand.u32 %v862, 4294901760
    %v864 = vsub.f32 %v862, %v863
    %v865 = vand.u32 %v864, 4294901760
    %866 = vmatpush1.msra.mxu0 %v865
    %867 = vmatprep.subr.mxu0 0.0
    %v868 = vand.u32 %v760, 4294901760
    %v869 = vsub.f32 %v760, %v868
    %v870 = vand.u32 %v869, 4294901760
    %v871 = vsub.f32 %v869, %v870
    %v872 = vand.u32 %v871, 4294901760
    %873 = vmatpush1.msra.mxu0 %v872
    %874 = vmatprep.subr.mxu0 0.0
    %v875 = vand.u32 %v759, 4294901760
    %v876 = vsub.f32 %v759, %v875
    %v877 = vand.u32 %v876, 4294901760
    %v878 = vsub.f32 %v876, %v877
    %v879 = vand.u32 %v878, 4294901760
    %880 = vmatpush1.msra.mxu0 %v879
    %881 = vmatprep.subr.mxu0 0.0
    %v882 = vand.u32 %v758, 4294901760
    %v883 = vsub.f32 %v758, %v882
    %v884 = vand.u32 %v883, 4294901760
    %v885 = vsub.f32 %v883, %v884
    %v886 = vand.u32 %v885, 4294901760
    %887 = vmatpush1.msra.mxu0 %v886
    %888 = vmatprep.subr.mxu0 0.0
    %v889 = vand.u32 %v757, 4294901760
    %v890 = vsub.f32 %v757, %v889
    %v891 = vand.u32 %v890, 4294901760
    %v892 = vsub.f32 %v890, %v891
    %v893 = vand.u32 %v892, 4294901760
    %894 = vmatpush1.msra.mxu0 %v893
    %895 = vmatprep.subr.mxu0 0.0
    %v896 = vand.u32 %v756, 4294901760
    %v897 = vsub.f32 %v756, %v896
    %v898 = vand.u32 %v897, 4294901760
    %v899 = vsub.f32 %v897, %v898
    %v900 = vand.u32 %v899, 4294901760
    %901 = vmatpush1.msra.mxu0 %v900
    %902 = vmatprep.subr.mxu0 0.0
    %v903 = vand.u32 %v755, 4294901760
    %v904 = vsub.f32 %v755, %v903
    %v905 = vand.u32 %v904, 4294901760
    %v906 = vsub.f32 %v904, %v905
    %v907 = vand.u32 %v906, 4294901760
    %908 = vmatpush1.msra.mxu0 %v907
    %909 = vmatprep.subr.mxu0 0.0
    %v910 = vand.u32 %v754, 4294901760
    %v911 = vsub.f32 %v754, %v910
    %v912 = vand.u32 %v911, 4294901760
    %v913 = vsub.f32 %v911, %v912
    %v914 = vand.u32 %v913, 4294901760
    %915 = vmatpush1.msra.mxu0 %v914
    %916 = vmatprep.subr.mxu0 0.0
    %v917 = vand.u32 %v753, 4294901760
    %v918 = vsub.f32 %v753, %v917
    %v919 = vand.u32 %v918, 4294901760
    %v920 = vsub.f32 %v918, %v919
    %v921 = vand.u32 %v920, 4294901760
    %922 = vmatpush1.msra.mxu0 %v921
    %923 = vmatprep.subr.mxu0 0.0
    %v924 = vand.u32 %v752, 4294901760
    %v925 = vsub.f32 %v752, %v924
    %v926 = vand.u32 %v925, 4294901760
    %v927 = vsub.f32 %v925, %v926
    %v928 = vand.u32 %v927, 4294901760
    %929 = vmatpush1.msra.mxu0 %v928
    %930 = vmatprep.subr.mxu0 0.0
    %v931 = vand.u32 %v751, 4294901760
    %v932 = vsub.f32 %v751, %v931
    %v933 = vand.u32 %v932, 4294901760
    %v934 = vsub.f32 %v932, %v933
    %v935 = vand.u32 %v934, 4294901760
    %936 = vmatpush1.msra.mxu0 %v935
    %937 = vmatprep.subr.mxu0 0.0
    %v938 = vand.u32 %v750, 4294901760
    %v939 = vsub.f32 %v750, %v938
    %v940 = vand.u32 %v939, 4294901760
    %v941 = vsub.f32 %v939, %v940
    %v942 = vand.u32 %v941, 4294901760
    %943 = vmatpush1.msra.mxu0 %v942
    %944 = vmatprep.subr.mxu0 0.0
    %v945 = vand.u32 %v749, 4294901760
    %v946 = vsub.f32 %v749, %v945
    %v947 = vand.u32 %v946, 4294901760
    %v948 = vsub.f32 %v946, %v947
    %v949 = vand.u32 %v948, 4294901760
    %950 = vmatpush1.msra.mxu0 %v949
    %951 = vmatprep.subr.mxu0 0.0
    %v952 = vand.u32 %v748, 4294901760
    %v953 = vsub.f32 %v748, %v952
    %v954 = vand.u32 %v953, 4294901760
    %v955 = vsub.f32 %v953, %v954
    %v956 = vand.u32 %v955, 4294901760
    %957 = vmatpush1.msra.mxu0 %v956
    %958 = vmatprep.subr.mxu0 0.0
    %v959 = vand.u32 %v747, 4294901760
    %v960 = vsub.f32 %v747, %v959
    %v961 = vand.u32 %v960, 4294901760
    %v962 = vsub.f32 %v960, %v961
    %v963 = vand.u32 %v962, 4294901760
    %964 = vmatpush1.msra.mxu0 %v963
    %965 = vmatprep.subr.mxu0 0.0
    %v966 = vand.u32 %v746, 4294901760
    %v967 = vsub.f32 %v746, %v966
    %v968 = vand.u32 %v967, 4294901760
    %v969 = vsub.f32 %v967, %v968
    %v970 = vand.u32 %v969, 4294901760
    %971 = vmatpush1.msra.mxu0 %v970
    %972 = vmatprep.subr.mxu0 0.0
    %973 = vmatpush2.msra.mxu0 0.0
    %974 = vmatprep.subr.mxu0 0.0
    %975 = vmatpush2.msra.mxu0 0.0
    %976 = vmatprep.subr.mxu0 0.0
    %977 = vmatpush2.msra.mxu0 0.0
    %978 = vmatprep.subr.mxu0 0.0
    %979 = vmatpush2.msra.mxu0 0.0
    %980 = vmatprep.subr.mxu0 0.0
    %981 = vmatpush2.msra.mxu0 0.0
    %982 = vmatprep.subr.mxu0 0.0
    %983 = vmatpush2.msra.mxu0 0.0
    %984 = vmatprep.subr.mxu0 0.0
    %985 = vmatpush2.msra.mxu0 0.0
    %986 = vmatprep.subr.mxu0 0.0
    %987 = vmatpush2.msra.mxu0 0.0
    %988 = vmatprep.subr.mxu0 0.0
    %989 = vmatpush2.msra.mxu0 0.0
    %990 = vmatprep.subr.mxu0 0.0
    %991 = vmatpush2.msra.mxu0 0.0
    %992 = vmatprep.subr.mxu0 0.0
    %993 = vmatpush2.msra.mxu0 0.0
    %994 = vmatprep.subr.mxu0 0.0
    %995 = vmatpush2.msra.mxu0 0.0
    %996 = vmatprep.subr.mxu0 0.0
    %997 = vmatpush2.msra.mxu0 0.0
    %998 = vmatprep.subr.mxu0 0.0
    %999 = vmatpush2.msra.mxu0 0.0
    %1000 = vmatprep.subr.mxu0 0.0
    %1001 = vmatpush2.msra.mxu0 0.0
    %1002 = vmatprep.subr.mxu0 0.0
    %1003 = vmatpush2.msra.mxu0 0.0
    %1004 = vmatprep.mubr.f32.mxu0 0.0
    %v1005 = vand.u32 %v745, 4294901760
    %1006 = vmatmul.mubr.f32.gmra.mxu0 %v1005
    %v1007 = vpop.f32.mrf.mxu0
    %v1008 = vadd.f32 %v857, %v1007
    %v1009 = vpop.f32.mrf.mxu0
    %1010 = vdwg.mxu0
    %1011 = vmatprep.subr.mxu0 0.0
    %v1012 = vand.u32 %v761, 4294901760
    %v1013 = vsub.f32 %v761, %v1012
    %1014 = vmatpush1.msra.mxu0 %v1013
    %1015 = vmatprep.subr.mxu0 0.0
    %v1016 = vand.u32 %v760, 4294901760
    %v1017 = vsub.f32 %v760, %v1016
    %1018 = vmatpush1.msra.mxu0 %v1017
    %1019 = vmatprep.subr.mxu0 0.0
    %v1020 = vand.u32 %v759, 4294901760
    %v1021 = vsub.f32 %v759, %v1020
    %1022 = vmatpush1.msra.mxu0 %v1021
    %1023 = vmatprep.subr.mxu0 0.0
    %v1024 = vand.u32 %v758, 4294901760
    %v1025 = vsub.f32 %v758, %v1024
    %1026 = vmatpush1.msra.mxu0 %v1025
    %1027 = vmatprep.subr.mxu0 0.0
    %v1028 = vand.u32 %v757, 4294901760
    %v1029 = vsub.f32 %v757, %v1028
    %1030 = vmatpush1.msra.mxu0 %v1029
    %1031 = vmatprep.subr.mxu0 0.0
    %v1032 = vand.u32 %v756, 4294901760
    %v1033 = vsub.f32 %v756, %v1032
    %1034 = vmatpush1.msra.mxu0 %v1033
    %1035 = vmatprep.subr.mxu0 0.0
    %v1036 = vand.u32 %v755, 4294901760
    %v1037 = vsub.f32 %v755, %v1036
    %1038 = vmatpush1.msra.mxu0 %v1037
    %1039 = vmatprep.subr.mxu0 0.0
    %v1040 = vand.u32 %v754, 4294901760
    %v1041 = vsub.f32 %v754, %v1040
    %1042 = vmatpush1.msra.mxu0 %v1041
    %1043 = vmatprep.subr.mxu0 0.0
    %v1044 = vand.u32 %v753, 4294901760
    %v1045 = vsub.f32 %v753, %v1044
    %1046 = vmatpush1.msra.mxu0 %v1045
    %1047 = vmatprep.subr.mxu0 0.0
    %v1048 = vand.u32 %v752, 4294901760
    %v1049 = vsub.f32 %v752, %v1048
    %1050 = vmatpush1.msra.mxu0 %v1049
    %1051 = vmatprep.subr.mxu0 0.0
    %v1052 = vand.u32 %v751, 4294901760
    %v1053 = vsub.f32 %v751, %v1052
    %1054 = vmatpush1.msra.mxu0 %v1053
    %1055 = vmatprep.subr.mxu0 0.0
    %v1056 = vand.u32 %v750, 4294901760
    %v1057 = vsub.f32 %v750, %v1056
    %1058 = vmatpush1.msra.mxu0 %v1057
    %1059 = vmatprep.subr.mxu0 0.0
    %v1060 = vand.u32 %v749, 4294901760
    %v1061 = vsub.f32 %v749, %v1060
    %1062 = vmatpush1.msra.mxu0 %v1061
    %1063 = vmatprep.subr.mxu0 0.0
    %v1064 = vand.u32 %v748, 4294901760
    %v1065 = vsub.f32 %v748, %v1064
    %1066 = vmatpush1.msra.mxu0 %v1065
    %1067 = vmatprep.subr.mxu0 0.0
    %v1068 = vand.u32 %v747, 4294901760
    %v1069 = vsub.f32 %v747, %v1068
    %1070 = vmatpush1.msra.mxu0 %v1069
    %1071 = vmatprep.subr.mxu0 0.0
    %v1072 = vand.u32 %v746, 4294901760
    %v1073 = vsub.f32 %v746, %v1072
    %1074 = vmatpush1.msra.mxu0 %v1073
    %1075 = vmatprep.subr.mxu0 0.0
    %1076 = vmatpush2.msra.mxu0 0.0
    %1077 = vmatprep.subr.mxu0 0.0
    %1078 = vmatpush2.msra.mxu0 0.0
    %1079 = vmatprep.subr.mxu0 0.0
    %1080 = vmatpush2.msra.mxu0 0.0
    %1081 = vmatprep.subr.mxu0 0.0
    %1082 = vmatpush2.msra.mxu0 0.0
    %1083 = vmatprep.subr.mxu0 0.0
    %1084 = vmatpush2.msra.mxu0 0.0
    %1085 = vmatprep.subr.mxu0 0.0
    %1086 = vmatpush2.msra.mxu0 0.0
    %1087 = vmatprep.subr.mxu0 0.0
    %1088 = vmatpush2.msra.mxu0 0.0
    %1089 = vmatprep.subr.mxu0 0.0
    %1090 = vmatpush2.msra.mxu0 0.0
    %1091 = vmatprep.subr.mxu0 0.0
    %1092 = vmatpush2.msra.mxu0 0.0
    %1093 = vmatprep.subr.mxu0 0.0
    %1094 = vmatpush2.msra.mxu0 0.0
    %1095 = vmatprep.subr.mxu0 0.0
    %1096 = vmatpush2.msra.mxu0 0.0
    %1097 = vmatprep.subr.mxu0 0.0
    %1098 = vmatpush2.msra.mxu0 0.0
    %1099 = vmatprep.subr.mxu0 0.0
    %1100 = vmatpush2.msra.mxu0 0.0
    %1101 = vmatprep.subr.mxu0 0.0
    %1102 = vmatpush2.msra.mxu0 0.0
    %1103 = vmatprep.subr.mxu0 0.0
    %1104 = vmatpush2.msra.mxu0 0.0
    %1105 = vmatprep.subr.mxu0 0.0
    %1106 = vmatpush2.msra.mxu0 0.0
    %1107 = vmatprep.mubr.f32.mxu0 0.0
    %v1108 = vand.u32 %v745, 4294901760
    %v1109 = vsub.f32 %v745, %v1108
    %1110 = vmatmul.mubr.f32.gmra.mxu0 %v1109
    %v1111 = vpop.f32.mrf.mxu0
    %v1112 = vadd.f32 %v1008, %v1111
    %v1113 = vpop.f32.mrf.mxu0
    %1114 = vdwg.mxu0
    %1115 = vmatprep.subr.mxu0 0.0
    %v1116 = vand.u32 %v761, 4294901760
    %1117 = vmatpush1.msra.mxu0 %v1116
    %1118 = vmatprep.subr.mxu0 0.0
    %v1119 = vand.u32 %v760, 4294901760
    %1120 = vmatpush1.msra.mxu0 %v1119
    %1121 = vmatprep.subr.mxu0 0.0
    %v1122 = vand.u32 %v759, 4294901760
    %1123 = vmatpush1.msra.mxu0 %v1122
    %1124 = vmatprep.subr.mxu0 0.0
    %v1125 = vand.u32 %v758, 4294901760
    %1126 = vmatpush1.msra.mxu0 %v1125
    %1127 = vmatprep.subr.mxu0 0.0
    %v1128 = vand.u32 %v757, 4294901760
    %1129 = vmatpush1.msra.mxu0 %v1128
    %1130 = vmatprep.subr.mxu0 0.0
    %v1131 = vand.u32 %v756, 4294901760
    %1132 = vmatpush1.msra.mxu0 %v1131
    %1133 = vmatprep.subr.mxu0 0.0
    %v1134 = vand.u32 %v755, 4294901760
    %1135 = vmatpush1.msra.mxu0 %v1134
    %1136 = vmatprep.subr.mxu0 0.0
    %v1137 = vand.u32 %v754, 4294901760
    %1138 = vmatpush1.msra.mxu0 %v1137
    %1139 = vmatprep.subr.mxu0 0.0
    %v1140 = vand.u32 %v753, 4294901760
    %1141 = vmatpush1.msra.mxu0 %v1140
    %1142 = vmatprep.subr.mxu0 0.0
    %v1143 = vand.u32 %v752, 4294901760
    %1144 = vmatpush1.msra.mxu0 %v1143
    %1145 = vmatprep.subr.mxu0 0.0
    %v1146 = vand.u32 %v751, 4294901760
    %1147 = vmatpush1.msra.mxu0 %v1146
    %1148 = vmatprep.subr.mxu0 0.0
    %v1149 = vand.u32 %v750, 4294901760
    %1150 = vmatpush1.msra.mxu0 %v1149
    %1151 = vmatprep.subr.mxu0 0.0
    %v1152 = vand.u32 %v749, 4294901760
    %1153 = vmatpush1.msra.mxu0 %v1152
    %1154 = vmatprep.subr.mxu0 0.0
    %v1155 = vand.u32 %v748, 4294901760
    %1156 = vmatpush1.msra.mxu0 %v1155
    %1157 = vmatprep.subr.mxu0 0.0
    %v1158 = vand.u32 %v747, 4294901760
    %1159 = vmatpush1.msra.mxu0 %v1158
    %1160 = vmatprep.subr.mxu0 0.0
    %v1161 = vand.u32 %v746, 4294901760
    %1162 = vmatpush1.msra.mxu0 %v1161
    %1163 = vmatprep.subr.mxu0 0.0
    %1164 = vmatpush2.msra.mxu0 0.0
    %1165 = vmatprep.subr.mxu0 0.0
    %1166 = vmatpush2.msra.mxu0 0.0
    %1167 = vmatprep.subr.mxu0 0.0
    %1168 = vmatpush2.msra.mxu0 0.0
    %1169 = vmatprep.subr.mxu0 0.0
    %1170 = vmatpush2.msra.mxu0 0.0
    %1171 = vmatprep.subr.mxu0 0.0
    %1172 = vmatpush2.msra.mxu0 0.0
    %1173 = vmatprep.subr.mxu0 0.0
    %1174 = vmatpush2.msra.mxu0 0.0
    %1175 = vmatprep.subr.mxu0 0.0
    %1176 = vmatpush2.msra.mxu0 0.0
    %1177 = vmatprep.subr.mxu0 0.0
    %1178 = vmatpush2.msra.mxu0 0.0
    %1179 = vmatprep.subr.mxu0 0.0
    %1180 = vmatpush2.msra.mxu0 0.0
    %1181 = vmatprep.subr.mxu0 0.0
    %1182 = vmatpush2.msra.mxu0 0.0
    %1183 = vmatprep.subr.mxu0 0.0
    %1184 = vmatpush2.msra.mxu0 0.0
    %1185 = vmatprep.subr.mxu0 0.0
    %1186 = vmatpush2.msra.mxu0 0.0
    %1187 = vmatprep.subr.mxu0 0.0
    %1188 = vmatpush2.msra.mxu0 0.0
    %1189 = vmatprep.subr.mxu0 0.0
    %1190 = vmatpush2.msra.mxu0 0.0
    %1191 = vmatprep.subr.mxu0 0.0
    %1192 = vmatpush2.msra.mxu0 0.0
    %1193 = vmatprep.subr.mxu0 0.0
    %1194 = vmatpush2.msra.mxu0 0.0
    %1195 = vmatprep.mubr.f32.mxu0 0.0
    %v1196 = vand.u32 %v745, 4294901760
    %v1197 = vsub.f32 %v745, %v1196
    %v1198 = vand.u32 %v1197, 4294901760
    %1199 = vmatmul.mubr.f32.gmra.mxu0 %v1198
    %v1200 = vpop.f32.mrf.mxu0
    %v1201 = vadd.f32 %v1112, %v1200
    %v1202 = vpop.f32.mrf.mxu0
    %1203 = vdwg.mxu0
    %1204 = vmatprep.subr.mxu0 0.0
    %v1205 = vand.u32 %v761, 4294901760
    %v1206 = vsub.f32 %v761, %v1205
    %v1207 = vand.u32 %v1206, 4294901760
    %1208 = vmatpush1.msra.mxu0 %v1207
    %1209 = vmatprep.subr.mxu0 0.0
    %v1210 = vand.u32 %v760, 4294901760
    %v1211 = vsub.f32 %v760, %v1210
    %v1212 = vand.u32 %v1211, 4294901760
    %1213 = vmatpush1.msra.mxu0 %v1212
    %1214 = vmatprep.subr.mxu0 0.0
    %v1215 = vand.u32 %v759, 4294901760
    %v1216 = vsub.f32 %v759, %v1215
    %v1217 = vand.u32 %v1216, 4294901760
    %1218 = vmatpush1.msra.mxu0 %v1217
    %1219 = vmatprep.subr.mxu0 0.0
    %v1220 = vand.u32 %v758, 4294901760
    %v1221 = vsub.f32 %v758, %v1220
    %v1222 = vand.u32 %v1221, 4294901760
    %1223 = vmatpush1.msra.mxu0 %v1222
    %1224 = vmatprep.subr.mxu0 0.0
    %v1225 = vand.u32 %v757, 4294901760
    %v1226 = vsub.f32 %v757, %v1225
    %v1227 = vand.u32 %v1226, 4294901760
    %1228 = vmatpush1.msra.mxu0 %v1227
    %1229 = vmatprep.subr.mxu0 0.0
    %v1230 = vand.u32 %v756, 4294901760
    %v1231 = vsub.f32 %v756, %v1230
    %v1232 = vand.u32 %v1231, 4294901760
    %1233 = vmatpush1.msra.mxu0 %v1232
    %1234 = vmatprep.subr.mxu0 0.0
    %v1235 = vand.u32 %v755, 4294901760
    %v1236 = vsub.f32 %v755, %v1235
    %v1237 = vand.u32 %v1236, 4294901760
    %1238 = vmatpush1.msra.mxu0 %v1237
    %1239 = vmatprep.subr.mxu0 0.0
    %v1240 = vand.u32 %v754, 4294901760
    %v1241 = vsub.f32 %v754, %v1240
    %v1242 = vand.u32 %v1241, 4294901760
    %1243 = vmatpush1.msra.mxu0 %v1242
    %1244 = vmatprep.subr.mxu0 0.0
    %v1245 = vand.u32 %v753, 4294901760
    %v1246 = vsub.f32 %v753, %v1245
    %v1247 = vand.u32 %v1246, 4294901760
    %1248 = vmatpush1.msra.mxu0 %v1247
    %1249 = vmatprep.subr.mxu0 0.0
    %v1250 = vand.u32 %v752, 4294901760
    %v1251 = vsub.f32 %v752, %v1250
    %v1252 = vand.u32 %v1251, 4294901760
    %1253 = vmatpush1.msra.mxu0 %v1252
    %1254 = vmatprep.subr.mxu0 0.0
    %v1255 = vand.u32 %v751, 4294901760
    %v1256 = vsub.f32 %v751, %v1255
    %v1257 = vand.u32 %v1256, 4294901760
    %1258 = vmatpush1.msra.mxu0 %v1257
    %1259 = vmatprep.subr.mxu0 0.0
    %v1260 = vand.u32 %v750, 4294901760
    %v1261 = vsub.f32 %v750, %v1260
    %v1262 = vand.u32 %v1261, 4294901760
    %1263 = vmatpush1.msra.mxu0 %v1262
    %1264 = vmatprep.subr.mxu0 0.0
    %v1265 = vand.u32 %v749, 4294901760
    %v1266 = vsub.f32 %v749, %v1265
    %v1267 = vand.u32 %v1266, 4294901760
    %1268 = vmatpush1.msra.mxu0 %v1267
    %1269 = vmatprep.subr.mxu0 0.0
    %v1270 = vand.u32 %v748, 4294901760
    %v1271 = vsub.f32 %v748, %v1270
    %v1272 = vand.u32 %v1271, 4294901760
    %1273 = vmatpush1.msra.mxu0 %v1272
    %1274 = vmatprep.subr.mxu0 0.0
    %v1275 = vand.u32 %v747, 4294901760
    %v1276 = vsub.f32 %v747, %v1275
    %v1277 = vand.u32 %v1276, 4294901760
    %1278 = vmatpush1.msra.mxu0 %v1277
    %1279 = vmatprep.subr.mxu0 0.0
    %v1280 = vand.u32 %v746, 4294901760
    %v1281 = vsub.f32 %v746, %v1280
    %v1282 = vand.u32 %v1281, 4294901760
    %1283 = vmatpush1.msra.mxu0 %v1282
    %1284 = vmatprep.subr.mxu0 0.0
    %1285 = vmatpush2.msra.mxu0 0.0
    %1286 = vmatprep.subr.mxu0 0.0
    %1287 = vmatpush2.msra.mxu0 0.0
    %1288 = vmatprep.subr.mxu0 0.0
    %1289 = vmatpush2.msra.mxu0 0.0
    %1290 = vmatprep.subr.mxu0 0.0
    %1291 = vmatpush2.msra.mxu0 0.0
    %1292 = vmatprep.subr.mxu0 0.0
    %1293 = vmatpush2.msra.mxu0 0.0
    %1294 = vmatprep.subr.mxu0 0.0
    %1295 = vmatpush2.msra.mxu0 0.0
    %1296 = vmatprep.subr.mxu0 0.0
    %1297 = vmatpush2.msra.mxu0 0.0
    %1298 = vmatprep.subr.mxu0 0.0
    %1299 = vmatpush2.msra.mxu0 0.0
    %1300 = vmatprep.subr.mxu0 0.0
    %1301 = vmatpush2.msra.mxu0 0.0
    %1302 = vmatprep.subr.mxu0 0.0
    %1303 = vmatpush2.msra.mxu0 0.0
    %1304 = vmatprep.subr.mxu0 0.0
    %1305 = vmatpush2.msra.mxu0 0.0
    %1306 = vmatprep.subr.mxu0 0.0
    %1307 = vmatpush2.msra.mxu0 0.0
    %1308 = vmatprep.subr.mxu0 0.0
    %1309 = vmatpush2.msra.mxu0 0.0
    %1310 = vmatprep.subr.mxu0 0.0
    %1311 = vmatpush2.msra.mxu0 0.0
    %1312 = vmatprep.subr.mxu0 0.0
    %1313 = vmatpush2.msra.mxu0 0.0
    %1314 = vmatprep.subr.mxu0 0.0
    %1315 = vmatpush2.msra.mxu0 0.0
    %1316 = vmatprep.mubr.f32.mxu0 0.0
    %v1317 = vand.u32 %v745, 4294901760
    %1318 = vmatmul.mubr.f32.gmra.mxu0 %v1317
    %v1319 = vpop.f32.mrf.mxu0
    %v1320 = vadd.f32 %v1201, %v1319
    %v1321 = vpop.f32.mrf.mxu0
    %1322 = vdwg.mxu0
    %1323 = vmatprep.subr.mxu0 0.0
    %v1324 = vand.u32 %v761, 4294901760
    %1325 = vmatpush1.msra.mxu0 %v1324
    %1326 = vmatprep.subr.mxu0 0.0
    %v1327 = vand.u32 %v760, 4294901760
    %1328 = vmatpush1.msra.mxu0 %v1327
    %1329 = vmatprep.subr.mxu0 0.0
    %v1330 = vand.u32 %v759, 4294901760
    %1331 = vmatpush1.msra.mxu0 %v1330
    %1332 = vmatprep.subr.mxu0 0.0
    %v1333 = vand.u32 %v758, 4294901760
    %1334 = vmatpush1.msra.mxu0 %v1333
    %1335 = vmatprep.subr.mxu0 0.0
    %v1336 = vand.u32 %v757, 4294901760
    %1337 = vmatpush1.msra.mxu0 %v1336
    %1338 = vmatprep.subr.mxu0 0.0
    %v1339 = vand.u32 %v756, 4294901760
    %1340 = vmatpush1.msra.mxu0 %v1339
    %1341 = vmatprep.subr.mxu0 0.0
    %v1342 = vand.u32 %v755, 4294901760
    %1343 = vmatpush1.msra.mxu0 %v1342
    %1344 = vmatprep.subr.mxu0 0.0
    %v1345 = vand.u32 %v754, 4294901760
    %1346 = vmatpush1.msra.mxu0 %v1345
    %1347 = vmatprep.subr.mxu0 0.0
    %v1348 = vand.u32 %v753, 4294901760
    %1349 = vmatpush1.msra.mxu0 %v1348
    %1350 = vmatprep.subr.mxu0 0.0
    %v1351 = vand.u32 %v752, 4294901760
    %1352 = vmatpush1.msra.mxu0 %v1351
    %1353 = vmatprep.subr.mxu0 0.0
    %v1354 = vand.u32 %v751, 4294901760
    %1355 = vmatpush1.msra.mxu0 %v1354
    %1356 = vmatprep.subr.mxu0 0.0
    %v1357 = vand.u32 %v750, 4294901760
    %1358 = vmatpush1.msra.mxu0 %v1357
    %1359 = vmatprep.subr.mxu0 0.0
    %v1360 = vand.u32 %v749, 4294901760
    %1361 = vmatpush1.msra.mxu0 %v1360
    %1362 = vmatprep.subr.mxu0 0.0
    %v1363 = vand.u32 %v748, 4294901760
    %1364 = vmatpush1.msra.mxu0 %v1363
    %1365 = vmatprep.subr.mxu0 0.0
    %v1366 = vand.u32 %v747, 4294901760
    %1367 = vmatpush1.msra.mxu0 %v1366
    %1368 = vmatprep.subr.mxu0 0.0
    %v1369 = vand.u32 %v746, 4294901760
    %1370 = vmatpush1.msra.mxu0 %v1369
    %1371 = vmatprep.subr.mxu0 0.0
    %1372 = vmatpush2.msra.mxu0 0.0
    %1373 = vmatprep.subr.mxu0 0.0
    %1374 = vmatpush2.msra.mxu0 0.0
    %1375 = vmatprep.subr.mxu0 0.0
    %1376 = vmatpush2.msra.mxu0 0.0
    %1377 = vmatprep.subr.mxu0 0.0
    %1378 = vmatpush2.msra.mxu0 0.0
    %1379 = vmatprep.subr.mxu0 0.0
    %1380 = vmatpush2.msra.mxu0 0.0
    %1381 = vmatprep.subr.mxu0 0.0
    %1382 = vmatpush2.msra.mxu0 0.0
    %1383 = vmatprep.subr.mxu0 0.0
    %1384 = vmatpush2.msra.mxu0 0.0
    %1385 = vmatprep.subr.mxu0 0.0
    %1386 = vmatpush2.msra.mxu0 0.0
    %1387 = vmatprep.subr.mxu0 0.0
    %1388 = vmatpush2.msra.mxu0 0.0
    %1389 = vmatprep.subr.mxu0 0.0
    %1390 = vmatpush2.msra.mxu0 0.0
    %1391 = vmatprep.subr.mxu0 0.0
    %1392 = vmatpush2.msra.mxu0 0.0
    %1393 = vmatprep.subr.mxu0 0.0
    %1394 = vmatpush2.msra.mxu0 0.0
    %1395 = vmatprep.subr.mxu0 0.0
    %1396 = vmatpush2.msra.mxu0 0.0
    %1397 = vmatprep.subr.mxu0 0.0
    %1398 = vmatpush2.msra.mxu0 0.0
    %1399 = vmatprep.subr.mxu0 0.0
    %1400 = vmatpush2.msra.mxu0 0.0
    %1401 = vmatprep.subr.mxu0 0.0
    %1402 = vmatpush2.msra.mxu0 0.0
    %1403 = vmatprep.mubr.f32.mxu0 0.0
    %v1404 = vand.u32 %v745, 4294901760
    %1405 = vmatmul.mubr.f32.gmra.mxu0 %v1404
    %v1406 = vpop.f32.mrf.mxu0
    %v1407 = vadd.f32 %v1320, %v1406
    %v1408 = vpop.f32.mrf.mxu0
    %1409 = vdwg.mxu0
    %v1410 = vmax.f32 %v1407, 0.0
    %v1411 = vld [vmem:[#allocation8] sm:$0xff]
    %v1412 = vld [vmem:[#allocation8 + $0x8] sm:$0xff]
    %v1413 = vld [vmem:[#allocation8 + $0x10] sm:$0xff]
    %v1414 = vld [vmem:[#allocation8 + $0x18] sm:$0xff]
    %v1415 = vld [vmem:[#allocation8 + $0x20] sm:$0xff]
    %v1416 = vld [vmem:[#allocation8 + $0x28] sm:$0xff]
    %v1417 = vld [vmem:[#allocation8 + $0x30] sm:$0xff]
    %v1418 = vld [vmem:[#allocation8 + $0x38] sm:$0xff]
    %v1419 = vld [vmem:[#allocation8 + $0x40] sm:$0xff]
    %v1420 = vld [vmem:[#allocation8 + $0x48] sm:$0xff]
    %v1421 = vld [vmem:[#allocation8 + $0x50] sm:$0xff]
    %v1422 = vld [vmem:[#allocation8 + $0x58] sm:$0xff]
    %v1423 = vld [vmem:[#allocation8 + $0x60] sm:$0xff]
    %v1424 = vld [vmem:[#allocation8 + $0x68] sm:$0xff]
    %v1425 = vld [vmem:[#allocation8 + $0x70] sm:$0xff]
    %v1426 = vld [vmem:[#allocation8 + $0x78] sm:$0xff]
    %v1427 = vld [vmem:[%s6] sm:$0x1]
    %v1429 = vlaneseq
    %v1430 = vshrl.u32 %v1429, 7
    %v1431 = vsub.s32 0, %v1430
    %v1432 = vrot.slane %v1427, %v1431
    %1434 = vmatprep.subr.mxu0 0.0
    %v1435 = vand.u32 %v1426, 4294901760
    %1436 = vmatpush1.msra.mxu0 %v1435
    %1437 = vmatprep.subr.mxu0 0.0
    %v1438 = vand.u32 %v1425, 4294901760
    %1439 = vmatpush1.msra.mxu0 %v1438
    %1440 = vmatprep.subr.mxu0 0.0
    %v1441 = vand.u32 %v1424, 4294901760
    %1442 = vmatpush1.msra.mxu0 %v1441
    %1443 = vmatprep.subr.mxu0 0.0
    %v1444 = vand.u32 %v1423, 4294901760
    %1445 = vmatpush1.msra.mxu0 %v1444
    %1446 = vmatprep.subr.mxu0 0.0
    %v1447 = vand.u32 %v1422, 4294901760
    %1448 = vmatpush1.msra.mxu0 %v1447
    %1449 = vmatprep.subr.mxu0 0.0
    %v1450 = vand.u32 %v1421, 4294901760
    %1451 = vmatpush1.msra.mxu0 %v1450
    %1452 = vmatprep.subr.mxu0 0.0
    %v1453 = vand.u32 %v1420, 4294901760
    %1454 = vmatpush1.msra.mxu0 %v1453
    %1455 = vmatprep.subr.mxu0 0.0
    %v1456 = vand.u32 %v1419, 4294901760
    %1457 = vmatpush1.msra.mxu0 %v1456
    %1458 = vmatprep.subr.mxu0 0.0
    %v1459 = vand.u32 %v1418, 4294901760
    %1460 = vmatpush1.msra.mxu0 %v1459
    %1461 = vmatprep.subr.mxu0 0.0
    %v1462 = vand.u32 %v1417, 4294901760
    %1463 = vmatpush1.msra.mxu0 %v1462
    %1464 = vmatprep.subr.mxu0 0.0
    %v1465 = vand.u32 %v1416, 4294901760
    %1466 = vmatpush1.msra.mxu0 %v1465
    %1467 = vmatprep.subr.mxu0 0.0
    %v1468 = vand.u32 %v1415, 4294901760
    %1469 = vmatpush1.msra.mxu0 %v1468
    %1470 = vmatprep.subr.mxu0 0.0
    %v1471 = vand.u32 %v1414, 4294901760
    %1472 = vmatpush1.msra.mxu0 %v1471
    %1473 = vmatprep.subr.mxu0 0.0
    %v1474 = vand.u32 %v1413, 4294901760
    %1475 = vmatpush1.msra.mxu0 %v1474
    %1476 = vmatprep.subr.mxu0 0.0
    %v1477 = vand.u32 %v1412, 4294901760
    %1478 = vmatpush1.msra.mxu0 %v1477
    %1479 = vmatprep.subr.mxu0 0.0
    %v1480 = vand.u32 %v1411, 4294901760
    %1481 = vmatpush1.msra.mxu0 %v1480
    %1482 = vmatprep.subr.mxu0 0.0
    %1483 = vmatpush2.msra.mxu0 0.0
    %1484 = vmatprep.subr.mxu0 0.0
    %1485 = vmatpush2.msra.mxu0 0.0
    %1486 = vmatprep.subr.mxu0 0.0
    %1487 = vmatpush2.msra.mxu0 0.0
    %1488 = vmatprep.subr.mxu0 0.0
    %1489 = vmatpush2.msra.mxu0 0.0
    %1490 = vmatprep.subr.mxu0 0.0
    %1491 = vmatpush2.msra.mxu0 0.0
    %1492 = vmatprep.subr.mxu0 0.0
    %1493 = vmatpush2.msra.mxu0 0.0
    %1494 = vmatprep.subr.mxu0 0.0
    %1495 = vmatpush2.msra.mxu0 0.0
    %1496 = vmatprep.subr.mxu0 0.0
    %1497 = vmatpush2.msra.mxu0 0.0
    %1498 = vmatprep.subr.mxu0 0.0
    %1499 = vmatpush2.msra.mxu0 0.0
    %1500 = vmatprep.subr.mxu0 0.0
    %1501 = vmatpush2.msra.mxu0 0.0
    %1502 = vmatprep.subr.mxu0 0.0
    %1503 = vmatpush2.msra.mxu0 0.0
    %1504 = vmatprep.subr.mxu0 0.0
    %1505 = vmatpush2.msra.mxu0 0.0
    %1506 = vmatprep.subr.mxu0 0.0
    %1507 = vmatpush2.msra.mxu0 0.0
    %1508 = vmatprep.subr.mxu0 0.0
    %1509 = vmatpush2.msra.mxu0 0.0
    %1510 = vmatprep.subr.mxu0 0.0
    %1511 = vmatpush2.msra.mxu0 0.0
    %1512 = vmatprep.subr.mxu0 0.0
    %1513 = vmatpush2.msra.mxu0 0.0
    %1514 = vmatprep.mubr.f32.mxu0 0.0
    %v1515 = vand.u32 %v1410, 4294901760
    %v1516 = vsub.f32 %v1410, %v1515
    %v1517 = vand.u32 %v1516, 4294901760
    %v1518 = vsub.f32 %v1516, %v1517
    %v1519 = vand.u32 %v1518, 4294901760
    %1520 = vmatmul.mubr.f32.gmra.mxu0 %v1519
    %v1521 = vpop.f32.mrf.mxu0
    %v1522 = vadd.f32 %v1432, %v1521
    %v1523 = vpop.f32.mrf.mxu0
    %1524 = vdwg.mxu0
    %1525 = vmatprep.subr.mxu0 0.0
    %v1526 = vand.u32 %v1426, 4294901760
    %v1527 = vsub.f32 %v1426, %v1526
    %v1528 = vand.u32 %v1527, 4294901760
    %v1529 = vsub.f32 %v1527, %v1528
    %v1530 = vand.u32 %v1529, 4294901760
    %1531 = vmatpush1.msra.mxu0 %v1530
    %1532 = vmatprep.subr.mxu0 0.0
    %v1533 = vand.u32 %v1425, 4294901760
    %v1534 = vsub.f32 %v1425, %v1533
    %v1535 = vand.u32 %v1534, 4294901760
    %v1536 = vsub.f32 %v1534, %v1535
    %v1537 = vand.u32 %v1536, 4294901760
    %1538 = vmatpush1.msra.mxu0 %v1537
    %1539 = vmatprep.subr.mxu0 0.0
    %v1540 = vand.u32 %v1424, 4294901760
    %v1541 = vsub.f32 %v1424, %v1540
    %v1542 = vand.u32 %v1541, 4294901760
    %v1543 = vsub.f32 %v1541, %v1542
    %v1544 = vand.u32 %v1543, 4294901760
    %1545 = vmatpush1.msra.mxu0 %v1544
    %1546 = vmatprep.subr.mxu0 0.0
    %v1547 = vand.u32 %v1423, 4294901760
    %v1548 = vsub.f32 %v1423, %v1547
    %v1549 = vand.u32 %v1548, 4294901760
    %v1550 = vsub.f32 %v1548, %v1549
    %v1551 = vand.u32 %v1550, 4294901760
    %1552 = vmatpush1.msra.mxu0 %v1551
    %1553 = vmatprep.subr.mxu0 0.0
    %v1554 = vand.u32 %v1422, 4294901760
    %v1555 = vsub.f32 %v1422, %v1554
    %v1556 = vand.u32 %v1555, 4294901760
    %v1557 = vsub.f32 %v1555, %v1556
    %v1558 = vand.u32 %v1557, 4294901760
    %1559 = vmatpush1.msra.mxu0 %v1558
    %1560 = vmatprep.subr.mxu0 0.0
    %v1561 = vand.u32 %v1421, 4294901760
    %v1562 = vsub.f32 %v1421, %v1561
    %v1563 = vand.u32 %v1562, 4294901760
    %v1564 = vsub.f32 %v1562, %v1563
    %v1565 = vand.u32 %v1564, 4294901760
    %1566 = vmatpush1.msra.mxu0 %v1565
    %1567 = vmatprep.subr.mxu0 0.0
    %v1568 = vand.u32 %v1420, 4294901760
    %v1569 = vsub.f32 %v1420, %v1568
    %v1570 = vand.u32 %v1569, 4294901760
    %v1571 = vsub.f32 %v1569, %v1570
    %v1572 = vand.u32 %v1571, 4294901760
    %1573 = vmatpush1.msra.mxu0 %v1572
    %1574 = vmatprep.subr.mxu0 0.0
    %v1575 = vand.u32 %v1419, 4294901760
    %v1576 = vsub.f32 %v1419, %v1575
    %v1577 = vand.u32 %v1576, 4294901760
    %v1578 = vsub.f32 %v1576, %v1577
    %v1579 = vand.u32 %v1578, 4294901760
    %1580 = vmatpush1.msra.mxu0 %v1579
    %1581 = vmatprep.subr.mxu0 0.0
    %v1582 = vand.u32 %v1418, 4294901760
    %v1583 = vsub.f32 %v1418, %v1582
    %v1584 = vand.u32 %v1583, 4294901760
    %v1585 = vsub.f32 %v1583, %v1584
    %v1586 = vand.u32 %v1585, 4294901760
    %1587 = vmatpush1.msra.mxu0 %v1586
    %1588 = vmatprep.subr.mxu0 0.0
    %v1589 = vand.u32 %v1417, 4294901760
    %v1590 = vsub.f32 %v1417, %v1589
    %v1591 = vand.u32 %v1590, 4294901760
    %v1592 = vsub.f32 %v1590, %v1591
    %v1593 = vand.u32 %v1592, 4294901760
    %1594 = vmatpush1.msra.mxu0 %v1593
    %1595 = vmatprep.subr.mxu0 0.0
    %v1596 = vand.u32 %v1416, 4294901760
    %v1597 = vsub.f32 %v1416, %v1596
    %v1598 = vand.u32 %v1597, 4294901760
    %v1599 = vsub.f32 %v1597, %v1598
    %v1600 = vand.u32 %v1599, 4294901760
    %1601 = vmatpush1.msra.mxu0 %v1600
    %1602 = vmatprep.subr.mxu0 0.0
    %v1603 = vand.u32 %v1415, 4294901760
    %v1604 = vsub.f32 %v1415, %v1603
    %v1605 = vand.u32 %v1604, 4294901760
    %v1606 = vsub.f32 %v1604, %v1605
    %v1607 = vand.u32 %v1606, 4294901760
    %1608 = vmatpush1.msra.mxu0 %v1607
    %1609 = vmatprep.subr.mxu0 0.0
    %v1610 = vand.u32 %v1414, 4294901760
    %v1611 = vsub.f32 %v1414, %v1610
    %v1612 = vand.u32 %v1611, 4294901760
    %v1613 = vsub.f32 %v1611, %v1612
    %v1614 = vand.u32 %v1613, 4294901760
    %1615 = vmatpush1.msra.mxu0 %v1614
    %1616 = vmatprep.subr.mxu0 0.0
    %v1617 = vand.u32 %v1413, 4294901760
    %v1618 = vsub.f32 %v1413, %v1617
    %v1619 = vand.u32 %v1618, 4294901760
    %v1620 = vsub.f32 %v1618, %v1619
    %v1621 = vand.u32 %v1620, 4294901760
    %1622 = vmatpush1.msra.mxu0 %v1621
    %1623 = vmatprep.subr.mxu0 0.0
    %v1624 = vand.u32 %v1412, 4294901760
    %v1625 = vsub.f32 %v1412, %v1624
    %v1626 = vand.u32 %v1625, 4294901760
    %v1627 = vsub.f32 %v1625, %v1626
    %v1628 = vand.u32 %v1627, 4294901760
    %1629 = vmatpush1.msra.mxu0 %v1628
    %1630 = vmatprep.subr.mxu0 0.0
    %v1631 = vand.u32 %v1411, 4294901760
    %v1632 = vsub.f32 %v1411, %v1631
    %v1633 = vand.u32 %v1632, 4294901760
    %v1634 = vsub.f32 %v1632, %v1633
    %v1635 = vand.u32 %v1634, 4294901760
    %1636 = vmatpush1.msra.mxu0 %v1635
    %1637 = vmatprep.subr.mxu0 0.0
    %1638 = vmatpush2.msra.mxu0 0.0
    %1639 = vmatprep.subr.mxu0 0.0
    %1640 = vmatpush2.msra.mxu0 0.0
    %1641 = vmatprep.subr.mxu0 0.0
    %1642 = vmatpush2.msra.mxu0 0.0
    %1643 = vmatprep.subr.mxu0 0.0
    %1644 = vmatpush2.msra.mxu0 0.0
    %1645 = vmatprep.subr.mxu0 0.0
    %1646 = vmatpush2.msra.mxu0 0.0
    %1647 = vmatprep.subr.mxu0 0.0
    %1648 = vmatpush2.msra.mxu0 0.0
    %1649 = vmatprep.subr.mxu0 0.0
    %1650 = vmatpush2.msra.mxu0 0.0
    %1651 = vmatprep.subr.mxu0 0.0
    %1652 = vmatpush2.msra.mxu0 0.0
    %1653 = vmatprep.subr.mxu0 0.0
    %1654 = vmatpush2.msra.mxu0 0.0
    %1655 = vmatprep.subr.mxu0 0.0
    %1656 = vmatpush2.msra.mxu0 0.0
    %1657 = vmatprep.subr.mxu0 0.0
    %1658 = vmatpush2.msra.mxu0 0.0
    %1659 = vmatprep.subr.mxu0 0.0
    %1660 = vmatpush2.msra.mxu0 0.0
    %1661 = vmatprep.subr.mxu0 0.0
    %1662 = vmatpush2.msra.mxu0 0.0
    %1663 = vmatprep.subr.mxu0 0.0
    %1664 = vmatpush2.msra.mxu0 0.0
    %1665 = vmatprep.subr.mxu0 0.0
    %1666 = vmatpush2.msra.mxu0 0.0
    %1667 = vmatprep.subr.mxu0 0.0
    %1668 = vmatpush2.msra.mxu0 0.0
    %1669 = vmatprep.mubr.f32.mxu0 0.0
    %v1670 = vand.u32 %v1410, 4294901760
    %1671 = vmatmul.mubr.f32.gmra.mxu0 %v1670
    %v1672 = vpop.f32.mrf.mxu0
    %v1673 = vadd.f32 %v1522, %v1672
    %v1674 = vpop.f32.mrf.mxu0
    %1675 = vdwg.mxu0
    %1676 = vmatprep.subr.mxu0 0.0
    %v1677 = vand.u32 %v1426, 4294901760
    %v1678 = vsub.f32 %v1426, %v1677
    %1679 = vmatpush1.msra.mxu0 %v1678
    %1680 = vmatprep.subr.mxu0 0.0
    %v1681 = vand.u32 %v1425, 4294901760
    %v1682 = vsub.f32 %v1425, %v1681
    %1683 = vmatpush1.msra.mxu0 %v1682
    %1684 = vmatprep.subr.mxu0 0.0
    %v1685 = vand.u32 %v1424, 4294901760
    %v1686 = vsub.f32 %v1424, %v1685
    %1687 = vmatpush1.msra.mxu0 %v1686
    %1688 = vmatprep.subr.mxu0 0.0
    %v1689 = vand.u32 %v1423, 4294901760
    %v1690 = vsub.f32 %v1423, %v1689
    %1691 = vmatpush1.msra.mxu0 %v1690
    %1692 = vmatprep.subr.mxu0 0.0
    %v1693 = vand.u32 %v1422, 4294901760
    %v1694 = vsub.f32 %v1422, %v1693
    %1695 = vmatpush1.msra.mxu0 %v1694
    %1696 = vmatprep.subr.mxu0 0.0
    %v1697 = vand.u32 %v1421, 4294901760
    %v1698 = vsub.f32 %v1421, %v1697
    %1699 = vmatpush1.msra.mxu0 %v1698
    %1700 = vmatprep.subr.mxu0 0.0
    %v1701 = vand.u32 %v1420, 4294901760
    %v1702 = vsub.f32 %v1420, %v1701
    %1703 = vmatpush1.msra.mxu0 %v1702
    %1704 = vmatprep.subr.mxu0 0.0
    %v1705 = vand.u32 %v1419, 4294901760
    %v1706 = vsub.f32 %v1419, %v1705
    %1707 = vmatpush1.msra.mxu0 %v1706
    %1708 = vmatprep.subr.mxu0 0.0
    %v1709 = vand.u32 %v1418, 4294901760
    %v1710 = vsub.f32 %v1418, %v1709
    %1711 = vmatpush1.msra.mxu0 %v1710
    %1712 = vmatprep.subr.mxu0 0.0
    %v1713 = vand.u32 %v1417, 4294901760
    %v1714 = vsub.f32 %v1417, %v1713
    %1715 = vmatpush1.msra.mxu0 %v1714
    %1716 = vmatprep.subr.mxu0 0.0
    %v1717 = vand.u32 %v1416, 4294901760
    %v1718 = vsub.f32 %v1416, %v1717
    %1719 = vmatpush1.msra.mxu0 %v1718
    %1720 = vmatprep.subr.mxu0 0.0
    %v1721 = vand.u32 %v1415, 4294901760
    %v1722 = vsub.f32 %v1415, %v1721
    %1723 = vmatpush1.msra.mxu0 %v1722
    %1724 = vmatprep.subr.mxu0 0.0
    %v1725 = vand.u32 %v1414, 4294901760
    %v1726 = vsub.f32 %v1414, %v1725
    %1727 = vmatpush1.msra.mxu0 %v1726
    %1728 = vmatprep.subr.mxu0 0.0
    %v1729 = vand.u32 %v1413, 4294901760
    %v1730 = vsub.f32 %v1413, %v1729
    %1731 = vmatpush1.msra.mxu0 %v1730
    %1732 = vmatprep.subr.mxu0 0.0
    %v1733 = vand.u32 %v1412, 4294901760
    %v1734 = vsub.f32 %v1412, %v1733
    %1735 = vmatpush1.msra.mxu0 %v1734
    %1736 = vmatprep.subr.mxu0 0.0
    %v1737 = vand.u32 %v1411, 4294901760
    %v1738 = vsub.f32 %v1411, %v1737
    %1739 = vmatpush1.msra.mxu0 %v1738
    %1740 = vmatprep.subr.mxu0 0.0
    %1741 = vmatpush2.msra.mxu0 0.0
    %1742 = vmatprep.subr.mxu0 0.0
    %1743 = vmatpush2.msra.mxu0 0.0
    %1744 = vmatprep.subr.mxu0 0.0
    %1745 = vmatpush2.msra.mxu0 0.0
    %1746 = vmatprep.subr.mxu0 0.0
    %1747 = vmatpush2.msra.mxu0 0.0
    %1748 = vmatprep.subr.mxu0 0.0
    %1749 = vmatpush2.msra.mxu0 0.0
    %1750 = vmatprep.subr.mxu0 0.0
    %1751 = vmatpush2.msra.mxu0 0.0
    %1752 = vmatprep.subr.mxu0 0.0
    %1753 = vmatpush2.msra.mxu0 0.0
    %1754 = vmatprep.subr.mxu0 0.0
    %1755 = vmatpush2.msra.mxu0 0.0
    %1756 = vmatprep.subr.mxu0 0.0
    %1757 = vmatpush2.msra.mxu0 0.0
    %1758 = vmatprep.subr.mxu0 0.0
    %1759 = vmatpush2.msra.mxu0 0.0
    %1760 = vmatprep.subr.mxu0 0.0
    %1761 = vmatpush2.msra.mxu0 0.0
    %1762 = vmatprep.subr.mxu0 0.0
    %1763 = vmatpush2.msra.mxu0 0.0
    %1764 = vmatprep.subr.mxu0 0.0
    %1765 = vmatpush2.msra.mxu0 0.0
    %1766 = vmatprep.subr.mxu0 0.0
    %1767 = vmatpush2.msra.mxu0 0.0
    %1768 = vmatprep.subr.mxu0 0.0
    %1769 = vmatpush2.msra.mxu0 0.0
    %1770 = vmatprep.subr.mxu0 0.0
    %1771 = vmatpush2.msra.mxu0 0.0
    %1772 = vmatprep.mubr.f32.mxu0 0.0
    %v1773 = vand.u32 %v1410, 4294901760
    %v1774 = vsub.f32 %v1410, %v1773
    %1775 = vmatmul.mubr.f32.gmra.mxu0 %v1774
    %v1776 = vpop.f32.mrf.mxu0
    %v1777 = vadd.f32 %v1673, %v1776
    %v1778 = vpop.f32.mrf.mxu0
    %1779 = vdwg.mxu0
    %1780 = vmatprep.subr.mxu0 0.0
    %v1781 = vand.u32 %v1426, 4294901760
    %1782 = vmatpush1.msra.mxu0 %v1781
    %1783 = vmatprep.subr.mxu0 0.0
    %v1784 = vand.u32 %v1425, 4294901760
    %1785 = vmatpush1.msra.mxu0 %v1784
    %1786 = vmatprep.subr.mxu0 0.0
    %v1787 = vand.u32 %v1424, 4294901760
    %1788 = vmatpush1.msra.mxu0 %v1787
    %1789 = vmatprep.subr.mxu0 0.0
    %v1790 = vand.u32 %v1423, 4294901760
    %1791 = vmatpush1.msra.mxu0 %v1790
    %1792 = vmatprep.subr.mxu0 0.0
    %v1793 = vand.u32 %v1422, 4294901760
    %1794 = vmatpush1.msra.mxu0 %v1793
    %1795 = vmatprep.subr.mxu0 0.0
    %v1796 = vand.u32 %v1421, 4294901760
    %1797 = vmatpush1.msra.mxu0 %v1796
    %1798 = vmatprep.subr.mxu0 0.0
    %v1799 = vand.u32 %v1420, 4294901760
    %1800 = vmatpush1.msra.mxu0 %v1799
    %1801 = vmatprep.subr.mxu0 0.0
    %v1802 = vand.u32 %v1419, 4294901760
    %1803 = vmatpush1.msra.mxu0 %v1802
    %1804 = vmatprep.subr.mxu0 0.0
    %v1805 = vand.u32 %v1418, 4294901760
    %1806 = vmatpush1.msra.mxu0 %v1805
    %1807 = vmatprep.subr.mxu0 0.0
    %v1808 = vand.u32 %v1417, 4294901760
    %1809 = vmatpush1.msra.mxu0 %v1808
    %1810 = vmatprep.subr.mxu0 0.0
    %v1811 = vand.u32 %v1416, 4294901760
    %1812 = vmatpush1.msra.mxu0 %v1811
    %1813 = vmatprep.subr.mxu0 0.0
    %v1814 = vand.u32 %v1415, 4294901760
    %1815 = vmatpush1.msra.mxu0 %v1814
    %1816 = vmatprep.subr.mxu0 0.0
    %v1817 = vand.u32 %v1414, 4294901760
    %1818 = vmatpush1.msra.mxu0 %v1817
    %1819 = vmatprep.subr.mxu0 0.0
    %v1820 = vand.u32 %v1413, 4294901760
    %1821 = vmatpush1.msra.mxu0 %v1820
    %1822 = vmatprep.subr.mxu0 0.0
    %v1823 = vand.u32 %v1412, 4294901760
    %1824 = vmatpush1.msra.mxu0 %v1823
    %1825 = vmatprep.subr.mxu0 0.0
    %v1826 = vand.u32 %v1411, 4294901760
    %1827 = vmatpush1.msra.mxu0 %v1826
    %1828 = vmatprep.subr.mxu0 0.0
    %1829 = vmatpush2.msra.mxu0 0.0
    %1830 = vmatprep.subr.mxu0 0.0
    %1831 = vmatpush2.msra.mxu0 0.0
    %1832 = vmatprep.subr.mxu0 0.0
    %1833 = vmatpush2.msra.mxu0 0.0
    %1834 = vmatprep.subr.mxu0 0.0
    %1835 = vmatpush2.msra.mxu0 0.0
    %1836 = vmatprep.subr.mxu0 0.0
    %1837 = vmatpush2.msra.mxu0 0.0
    %1838 = vmatprep.subr.mxu0 0.0
    %1839 = vmatpush2.msra.mxu0 0.0
    %1840 = vmatprep.subr.mxu0 0.0
    %1841 = vmatpush2.msra.mxu0 0.0
    %1842 = vmatprep.subr.mxu0 0.0
    %1843 = vmatpush2.msra.mxu0 0.0
    %1844 = vmatprep.subr.mxu0 0.0
    %1845 = vmatpush2.msra.mxu0 0.0
    %1846 = vmatprep.subr.mxu0 0.0
    %1847 = vmatpush2.msra.mxu0 0.0
    %1848 = vmatprep.subr.mxu0 0.0
    %1849 = vmatpush2.msra.mxu0 0.0
    %1850 = vmatprep.subr.mxu0 0.0
    %1851 = vmatpush2.msra.mxu0 0.0
    %1852 = vmatprep.subr.mxu0 0.0
    %1853 = vmatpush2.msra.mxu0 0.0
    %1854 = vmatprep.subr.mxu0 0.0
    %1855 = vmatpush2.msra.mxu0 0.0
    %1856 = vmatprep.subr.mxu0 0.0
    %1857 = vmatpush2.msra.mxu0 0.0
    %1858 = vmatprep.subr.mxu0 0.0
    %1859 = vmatpush2.msra.mxu0 0.0
    %1860 = vmatprep.mubr.f32.mxu0 0.0
    %v1861 = vand.u32 %v1410, 4294901760
    %v1862 = vsub.f32 %v1410, %v1861
    %v1863 = vand.u32 %v1862, 4294901760
    %1864 = vmatmul.mubr.f32.gmra.mxu0 %v1863
    %v1865 = vpop.f32.mrf.mxu0
    %v1866 = vadd.f32 %v1777, %v1865
    %v1867 = vpop.f32.mrf.mxu0
    %1868 = vdwg.mxu0
    %1869 = vmatprep.subr.mxu0 0.0
    %v1870 = vand.u32 %v1426, 4294901760
    %v1871 = vsub.f32 %v1426, %v1870
    %v1872 = vand.u32 %v1871, 4294901760
    %1873 = vmatpush1.msra.mxu0 %v1872
    %1874 = vmatprep.subr.mxu0 0.0
    %v1875 = vand.u32 %v1425, 4294901760
    %v1876 = vsub.f32 %v1425, %v1875
    %v1877 = vand.u32 %v1876, 4294901760
    %1878 = vmatpush1.msra.mxu0 %v1877
    %1879 = vmatprep.subr.mxu0 0.0
    %v1880 = vand.u32 %v1424, 4294901760
    %v1881 = vsub.f32 %v1424, %v1880
    %v1882 = vand.u32 %v1881, 4294901760
    %1883 = vmatpush1.msra.mxu0 %v1882
    %1884 = vmatprep.subr.mxu0 0.0
    %v1885 = vand.u32 %v1423, 4294901760
    %v1886 = vsub.f32 %v1423, %v1885
    %v1887 = vand.u32 %v1886, 4294901760
    %1888 = vmatpush1.msra.mxu0 %v1887
    %1889 = vmatprep.subr.mxu0 0.0
    %v1890 = vand.u32 %v1422, 4294901760
    %v1891 = vsub.f32 %v1422, %v1890
    %v1892 = vand.u32 %v1891, 4294901760
    %1893 = vmatpush1.msra.mxu0 %v1892
    %1894 = vmatprep.subr.mxu0 0.0
    %v1895 = vand.u32 %v1421, 4294901760
    %v1896 = vsub.f32 %v1421, %v1895
    %v1897 = vand.u32 %v1896, 4294901760
    %1898 = vmatpush1.msra.mxu0 %v1897
    %1899 = vmatprep.subr.mxu0 0.0
    %v1900 = vand.u32 %v1420, 4294901760
    %v1901 = vsub.f32 %v1420, %v1900
    %v1902 = vand.u32 %v1901, 4294901760
    %1903 = vmatpush1.msra.mxu0 %v1902
    %1904 = vmatprep.subr.mxu0 0.0
    %v1905 = vand.u32 %v1419, 4294901760
    %v1906 = vsub.f32 %v1419, %v1905
    %v1907 = vand.u32 %v1906, 4294901760
    %1908 = vmatpush1.msra.mxu0 %v1907
    %1909 = vmatprep.subr.mxu0 0.0
    %v1910 = vand.u32 %v1418, 4294901760
    %v1911 = vsub.f32 %v1418, %v1910
    %v1912 = vand.u32 %v1911, 4294901760
    %1913 = vmatpush1.msra.mxu0 %v1912
    %1914 = vmatprep.subr.mxu0 0.0
    %v1915 = vand.u32 %v1417, 4294901760
    %v1916 = vsub.f32 %v1417, %v1915
    %v1917 = vand.u32 %v1916, 4294901760
    %1918 = vmatpush1.msra.mxu0 %v1917
    %1919 = vmatprep.subr.mxu0 0.0
    %v1920 = vand.u32 %v1416, 4294901760
    %v1921 = vsub.f32 %v1416, %v1920
    %v1922 = vand.u32 %v1921, 4294901760
    %1923 = vmatpush1.msra.mxu0 %v1922
    %1924 = vmatprep.subr.mxu0 0.0
    %v1925 = vand.u32 %v1415, 4294901760
    %v1926 = vsub.f32 %v1415, %v1925
    %v1927 = vand.u32 %v1926, 4294901760
    %1928 = vmatpush1.msra.mxu0 %v1927
    %1929 = vmatprep.subr.mxu0 0.0
    %v1930 = vand.u32 %v1414, 4294901760
    %v1931 = vsub.f32 %v1414, %v1930
    %v1932 = vand.u32 %v1931, 4294901760
    %1933 = vmatpush1.msra.mxu0 %v1932
    %1934 = vmatprep.subr.mxu0 0.0
    %v1935 = vand.u32 %v1413, 4294901760
    %v1936 = vsub.f32 %v1413, %v1935
    %v1937 = vand.u32 %v1936, 4294901760
    %1938 = vmatpush1.msra.mxu0 %v1937
    %1939 = vmatprep.subr.mxu0 0.0
    %v1940 = vand.u32 %v1412, 4294901760
    %v1941 = vsub.f32 %v1412, %v1940
    %v1942 = vand.u32 %v1941, 4294901760
    %1943 = vmatpush1.msra.mxu0 %v1942
    %1944 = vmatprep.subr.mxu0 0.0
    %v1945 = vand.u32 %v1411, 4294901760
    %v1946 = vsub.f32 %v1411, %v1945
    %v1947 = vand.u32 %v1946, 4294901760
    %1948 = vmatpush1.msra.mxu0 %v1947
    %1949 = vmatprep.subr.mxu0 0.0
    %1950 = vmatpush2.msra.mxu0 0.0
    %1951 = vmatprep.subr.mxu0 0.0
    %1952 = vmatpush2.msra.mxu0 0.0
    %1953 = vmatprep.subr.mxu0 0.0
    %1954 = vmatpush2.msra.mxu0 0.0
    %1955 = vmatprep.subr.mxu0 0.0
    %1956 = vmatpush2.msra.mxu0 0.0
    %1957 = vmatprep.subr.mxu0 0.0
    %1958 = vmatpush2.msra.mxu0 0.0
    %1959 = vmatprep.subr.mxu0 0.0
    %1960 = vmatpush2.msra.mxu0 0.0
    %1961 = vmatprep.subr.mxu0 0.0
    %1962 = vmatpush2.msra.mxu0 0.0
    %1963 = vmatprep.subr.mxu0 0.0
    %1964 = vmatpush2.msra.mxu0 0.0
    %1965 = vmatprep.subr.mxu0 0.0
    %1966 = vmatpush2.msra.mxu0 0.0
    %1967 = vmatprep.subr.mxu0 0.0
    %1968 = vmatpush2.msra.mxu0 0.0
    %1969 = vmatprep.subr.mxu0 0.0
    %1970 = vmatpush2.msra.mxu0 0.0
    %1971 = vmatprep.subr.mxu0 0.0
    %1972 = vmatpush2.msra.mxu0 0.0
    %1973 = vmatprep.subr.mxu0 0.0
    %1974 = vmatpush2.msra.mxu0 0.0
    %1975 = vmatprep.subr.mxu0 0.0
    %1976 = vmatpush2.msra.mxu0 0.0
    %1977 = vmatprep.subr.mxu0 0.0
    %1978 = vmatpush2.msra.mxu0 0.0
    %1979 = vmatprep.subr.mxu0 0.0
    %1980 = vmatpush2.msra.mxu0 0.0
    %1981 = vmatprep.mubr.f32.mxu0 0.0
    %v1982 = vand.u32 %v1410, 4294901760
    %1983 = vmatmul.mubr.f32.gmra.mxu0 %v1982
    %v1984 = vpop.f32.mrf.mxu0
    %v1985 = vadd.f32 %v1866, %v1984
    %v1986 = vpop.f32.mrf.mxu0
    %1987 = vdwg.mxu0
    %1988 = vmatprep.subr.mxu0 0.0
    %v1989 = vand.u32 %v1426, 4294901760
    %1990 = vmatpush1.msra.mxu0 %v1989
    %1991 = vmatprep.subr.mxu0 0.0
    %v1992 = vand.u32 %v1425, 4294901760
    %1993 = vmatpush1.msra.mxu0 %v1992
    %1994 = vmatprep.subr.mxu0 0.0
    %v1995 = vand.u32 %v1424, 4294901760
    %1996 = vmatpush1.msra.mxu0 %v1995
    %1997 = vmatprep.subr.mxu0 0.0
    %v1998 = vand.u32 %v1423, 4294901760
    %1999 = vmatpush1.msra.mxu0 %v1998
    %2000 = vmatprep.subr.mxu0 0.0
    %v2001 = vand.u32 %v1422, 4294901760
    %2002 = vmatpush1.msra.mxu0 %v2001
    %2003 = vmatprep.subr.mxu0 0.0
    %v2004 = vand.u32 %v1421, 4294901760
    %2005 = vmatpush1.msra.mxu0 %v2004
    %2006 = vmatprep.subr.mxu0 0.0
    %v2007 = vand.u32 %v1420, 4294901760
    %2008 = vmatpush1.msra.mxu0 %v2007
    %2009 = vmatprep.subr.mxu0 0.0
    %v2010 = vand.u32 %v1419, 4294901760
    %2011 = vmatpush1.msra.mxu0 %v2010
    %2012 = vmatprep.subr.mxu0 0.0
    %v2013 = vand.u32 %v1418, 4294901760
    %2014 = vmatpush1.msra.mxu0 %v2013
    %2015 = vmatprep.subr.mxu0 0.0
    %v2016 = vand.u32 %v1417, 4294901760
    %2017 = vmatpush1.msra.mxu0 %v2016
    %2018 = vmatprep.subr.mxu0 0.0
    %v2019 = vand.u32 %v1416, 4294901760
    %2020 = vmatpush1.msra.mxu0 %v2019
    %2021 = vmatprep.subr.mxu0 0.0
    %v2022 = vand.u32 %v1415, 4294901760
    %2023 = vmatpush1.msra.mxu0 %v2022
    %2024 = vmatprep.subr.mxu0 0.0
    %v2025 = vand.u32 %v1414, 4294901760
    %2026 = vmatpush1.msra.mxu0 %v2025
    %2027 = vmatprep.subr.mxu0 0.0
    %v2028 = vand.u32 %v1413, 4294901760
    %2029 = vmatpush1.msra.mxu0 %v2028
    %2030 = vmatprep.subr.mxu0 0.0
    %v2031 = vand.u32 %v1412, 4294901760
    %2032 = vmatpush1.msra.mxu0 %v2031
    %2033 = vmatprep.subr.mxu0 0.0
    %v2034 = vand.u32 %v1411, 4294901760
    %2035 = vmatpush1.msra.mxu0 %v2034
    %2036 = vmatprep.subr.mxu0 0.0
    %2037 = vmatpush2.msra.mxu0 0.0
    %2038 = vmatprep.subr.mxu0 0.0
    %2039 = vmatpush2.msra.mxu0 0.0
    %2040 = vmatprep.subr.mxu0 0.0
    %2041 = vmatpush2.msra.mxu0 0.0
    %2042 = vmatprep.subr.mxu0 0.0
    %2043 = vmatpush2.msra.mxu0 0.0
    %2044 = vmatprep.subr.mxu0 0.0
    %2045 = vmatpush2.msra.mxu0 0.0
    %2046 = vmatprep.subr.mxu0 0.0
    %2047 = vmatpush2.msra.mxu0 0.0
    %2048 = vmatprep.subr.mxu0 0.0
    %2049 = vmatpush2.msra.mxu0 0.0
    %2050 = vmatprep.subr.mxu0 0.0
    %2051 = vmatpush2.msra.mxu0 0.0
    %2052 = vmatprep.subr.mxu0 0.0
    %2053 = vmatpush2.msra.mxu0 0.0
    %2054 = vmatprep.subr.mxu0 0.0
    %2055 = vmatpush2.msra.mxu0 0.0
    %2056 = vmatprep.subr.mxu0 0.0
    %2057 = vmatpush2.msra.mxu0 0.0
    %2058 = vmatprep.subr.mxu0 0.0
    %2059 = vmatpush2.msra.mxu0 0.0
    %2060 = vmatprep.subr.mxu0 0.0
    %2061 = vmatpush2.msra.mxu0 0.0
    %2062 = vmatprep.subr.mxu0 0.0
    %2063 = vmatpush2.msra.mxu0 0.0
    %2064 = vmatprep.subr.mxu0 0.0
    %2065 = vmatpush2.msra.mxu0 0.0
    %2066 = vmatprep.subr.mxu0 0.0
    %2067 = vmatpush2.msra.mxu0 0.0
    %2068 = vmatprep.mubr.f32.mxu0 0.0
    %v2069 = vand.u32 %v1410, 4294901760
    %2070 = vmatmul.mubr.f32.gmra.mxu0 %v2069
    %v2071 = vpop.f32.mrf.mxu0
    %v2072 = vadd.f32 %v1985, %v2071
    %v2073 = vpop.f32.mrf.mxu0
    %2074 = vdwg.mxu0
    %2075 = vst [vmem:[#allocation10] sm:$0xff] %v2072
    // Predicated region
    $region46: #{tpu_custom_call.1} parent=1 // pred_check
      _
    $region47: #{tpu_custom_call.1} parent=1 // pred_check_branch
      %2077 = sbr.rel (0) target = $region49
    $region48: #{tpu_custom_call.1} parent=1 // pred_region
      %s2079 = ssub.s32 128, 128
      %2080 = vsyncadd [#allocation4], %s2079
      %s2082 = sshll.u32 [#allocation10], 4
      %s2083 = int_to_ptr.vmem [resolvable:$true] %s2082
      %2085 = dma.vmem_to_hbm [thread:$0]  %s2083, 128, %s7, [#allocation4]
    $region49: #{tpu_custom_call.1} parent=1 // pred_fallthru
      _
    // Predicated region
    $region50: #{tpu_custom_call.1} parent=1 // pred_check
      _
    $region51: #{tpu_custom_call.1} parent=1 // pred_check_branch
      %2087 = sbr.rel (0) target = $region53
    $region52: #{tpu_custom_call.1} parent=1 // pred_region
      %2088 = dma.done [#allocation4], 128
    $region53: #{tpu_custom_call.1} parent=1 // pred_fallthru
      _
    %2089 = vsyncpa [#allocation3], 1
    %2090 = vsyncpa [#allocation6], 1
    %2091 = vsyncpa [#allocation9], 1
    %2092 = vsyncpa [#allocation4], 1

</llo_original>
